<compile_context>
chip_gen: v6e
topology: v6e:2x2x1
jax: 0.10.0
libtpu: 0.0.40
codegen_flags: <defaults>
</compile_context>

<pallas_src>
import jax
import jax.numpy as jnp
from jax.experimental import pallas as pl
from jax.experimental.pallas import tpu as pltpu


def _hardswish(x):
    # PyTorch nn.Hardswish: x * relu6(x + 3) / 6
    return x * jnp.clip(x + 3.0, 0.0, 6.0) * (1.0 / 6.0)


def densenet_kernel(x1_ref, w1_ref, b1_ref, w2a_ref, w2b_ref, b2_ref, o_ref):
    D = x1_ref.shape[1]
    x1 = x1_ref[...]                                              # (TB, D)

    # dense1: Linear(D, D) + Hardswish   (MXU matmul, f32 accumulation)
    h1 = _hardswish(
        jnp.dot(x1, w1_ref[...], preferred_element_type=jnp.float32)
        + b1_ref[...]
    )                                                             # (TB, D)

    # dense2 on cat([x1, h1]) without materializing the concat:
    #   cat([x1, h1]) @ W2^T == x1 @ W2^T[:D, :] + h1 @ W2^T[D:, :]
    h2 = _hardswish(
        jnp.dot(x1, w2a_ref[...], preferred_element_type=jnp.float32)
        + jnp.dot(h1, w2b_ref[...], preferred_element_type=jnp.float32)
        + b2_ref[...]
    )                                                             # (TB, 2D)

    # Direct slice stores of the three output pieces (no concatenates).
    o_ref[:, :D] = x1
    o_ref[:, D:2 * D] = h1.astype(o_ref.dtype)
    o_ref[:, 2 * D:] = h2.astype(o_ref.dtype)


def prepare_densenet_params(w1, b1, w2, b2):
    """One-time conversion of torch-layout (out, in) params to kernel layout.

    Call once when parameters are loaded -- NOT inside the per-call forward --
    so the weight transposes are not re-emitted (extra HBM read+write of both
    weight matrices) on every invocation.
    """
    D = w1.shape[0]
    w1_t = jnp.asarray(w1, jnp.float32).T                # (D, D):   x @ W1^T
    w2_t = jnp.asarray(w2, jnp.float32).T                # (2D, 2D)
    w2_top = w2_t[:D, :]                                 # multiplies x1
    w2_bot = w2_t[D:, :]                                 # multiplies h1
    b1_r = jnp.asarray(b1, jnp.float32).reshape(1, D)
    b2_r = jnp.asarray(b2, jnp.float32).reshape(1, 2 * D)
    return w1_t, b1_r, w2_top, w2_bot, b2_r


def _choose_block_b(batch, desired):
    bb = max(1, min(desired, batch))
    while batch % bb != 0:
        bb -= 1
    return bb


def densenet_forward(x1, params, *, block_b=256):
    """x1: (B, D) f32.  params: output of prepare_densenet_params()."""
    w1_t, b1_r, w2_top, w2_bot, b2_r = params
    B, D = x1.shape
    bb = _choose_block_b(B, block_b)

    return pl.pallas_call(
        densenet_kernel,
        out_shape=jax.ShapeDtypeStruct((B, 4 * D), jnp.float32),
        grid_spec=pltpu.PrefetchScalarGridSpec(
            num_scalar_prefetch=0,
            grid=(B // bb,),
            in_specs=[
                pl.BlockSpec((bb, D), lambda i: (i, 0)),          # x1 tile
                pl.BlockSpec((D, D), lambda i: (0, 0)),           # W1^T
                pl.BlockSpec((1, D), lambda i: (0, 0)),           # b1
                pl.BlockSpec((D, 2 * D), lambda i: (0, 0)),       # W2^T top
                pl.BlockSpec((D, 2 * D), lambda i: (0, 0)),       # W2^T bottom
                pl.BlockSpec((1, 2 * D), lambda i: (0, 0)),       # b2
            ],
            out_specs=pl.BlockSpec((bb, 4 * D), lambda i: (i, 0)),
        ),
        compiler_params=pltpu.CompilerParams(
            dimension_semantics=("parallel",),
        ),
    )(x1, w1_t, b1_r, w2_top, w2_bot, b2_r)


def densenet_reference(x1, w1, b1, w2, b2):
    def hsw(x):
        return x * jnp.clip(x + 3.0, 0.0, 6.0) / 6.0
    h1 = hsw(x1 @ w1.T + b1)
    x2 = jnp.concatenate([x1, h1], axis=1)
    h2 = hsw(x2 @ w2.T + b2)
    return jnp.concatenate([x2, h2], axis=1)


if __name__ == "__main__":
    lay_dim = 32
    batch = 512          # block_b=256 -> 2 grid steps (keeps both v7x TCs busy)

    key = jax.random.PRNGKey(0)
    k_x, k_w1, k_b1, k_w2, k_b2 = jax.random.split(key, 5)

    # Deterministic synthetic parameters (torch nn.Linear layout: (out, in)).
    x1 = jax.random.normal(k_x, (batch, lay_dim), dtype=jnp.float32)
    w1 = jax.random.normal(k_w1, (lay_dim, lay_dim), dtype=jnp.float32) * 0.1
    b1 = jax.random.normal(k_b1, (lay_dim,), dtype=jnp.float32) * 0.1
    w2 = jax.random.normal(k_w2, (2 * lay_dim, 2 * lay_dim), dtype=jnp.float32) * 0.1
    b2 = jax.random.normal(k_b2, (2 * lay_dim,), dtype=jnp.float32) * 0.1

    # One-time parameter preparation (transpose + split W2), then forward.
    params = jax.block_until_ready(prepare_densenet_params(w1, b1, w2, b2))
    out = jax.block_until_ready(densenet_forward(x1, params, block_b=256))

    ref = densenet_reference(x1, w1, b1, w2, b2)
    assert out.shape == (batch, 4 * lay_dim), out.shape
    assert jnp.allclose(out, ref, atol=2e-5, rtol=2e-5), "mismatch vs reference"

    print("KERNEL_OK")
</pallas_src>

<mosaic_0001>
module attributes {stable_mosaic.version = 11 : i64} {
  func.func @densenet_kernel(%arg0: i32, %arg1: memref<256x32xf32, #tpu.memory_space<vmem>>, %arg2: memref<32x32xf32, #tpu.memory_space<vmem>>, %arg3: memref<1x32xf32, #tpu.memory_space<vmem>>, %arg4: memref<32x64xf32, #tpu.memory_space<vmem>>, %arg5: memref<32x64xf32, #tpu.memory_space<vmem>>, %arg6: memref<1x64xf32, #tpu.memory_space<vmem>>, %arg7: memref<256x128xf32, #tpu.memory_space<vmem>>) attributes {dimension_semantics = [#tpu.dimension_semantics<parallel>], iteration_bounds = array<i64: 2>, scalar_prefetch = 0 : i64, scratch_operands = 0 : i64, tpu.core_type = #tpu.core_type<tc>, window_params = [{transform_indices = @transform_0, window_bounds = array<i64: 256, 32>}, {pipeline_mode = #tpu.pipeline_mode<synchronous>, transform_indices = @transform_1, window_bounds = array<i64: 32, 32>}, {pipeline_mode = #tpu.pipeline_mode<synchronous>, transform_indices = @transform_2, window_bounds = array<i64: 1, 32>}, {pipeline_mode = #tpu.pipeline_mode<synchronous>, transform_indices = @transform_3, window_bounds = array<i64: 32, 64>}, {pipeline_mode = #tpu.pipeline_mode<synchronous>, transform_indices = @transform_4, window_bounds = array<i64: 32, 64>}, {pipeline_mode = #tpu.pipeline_mode<synchronous>, transform_indices = @transform_5, window_bounds = array<i64: 1, 64>}, {transform_indices = @transform_6, window_bounds = array<i64: 256, 128>}]} {
    %c0 = arith.constant 0 : index
    %c0_0 = arith.constant 0 : index
    %0 = vector.load %arg1[%c0, %c0_0] : memref<256x32xf32, #tpu.memory_space<vmem>>, vector<256x32xf32>
    %c0_1 = arith.constant 0 : index
    %c0_2 = arith.constant 0 : index
    %1 = vector.load %arg2[%c0_1, %c0_2] : memref<32x32xf32, #tpu.memory_space<vmem>>, vector<32x32xf32>
    %cst = arith.constant dense<0.000000e+00> : vector<256x32xf32>
    %2 = tpu.matmul %0, %1, %cst {dimension_numbers = #tpu.dot_dimension_numbers<[1], [0], [0], [1], [0, 0, 1, 1], [], []>} : vector<256x32xf32>, vector<32x32xf32>, vector<256x32xf32> -> vector<256x32xf32>
    %c0_3 = arith.constant 0 : index
    %c0_4 = arith.constant 0 : index
    %3 = vector.load %arg3[%c0_3, %c0_4] : memref<1x32xf32, #tpu.memory_space<vmem>>, vector<1x32xf32>
    %4 = vector.broadcast %3 : vector<1x32xf32> to vector<256x32xf32>
    %5 = arith.addf %2, %4 : vector<256x32xf32>
    %cst_5 = arith.constant 3.000000e+00 : f32
    %6 = vector.broadcast %cst_5 : f32 to vector<256x32xf32>
    %7 = arith.addf %5, %6 : vector<256x32xf32>
    %cst_6 = arith.constant 0.000000e+00 : f32
    %cst_7 = arith.constant 6.000000e+00 : f32
    %8 = vector.broadcast %cst_6 : f32 to vector<256x32xf32>
    %9 = arith.maximumf %8, %7 : vector<256x32xf32>
    %10 = vector.broadcast %cst_7 : f32 to vector<256x32xf32>
    %11 = arith.minimumf %10, %9 : vector<256x32xf32>
    %12 = arith.mulf %5, %11 : vector<256x32xf32>
    %cst_8 = arith.constant 0.166666672 : f32
    %13 = vector.broadcast %cst_8 : f32 to vector<256x32xf32>
    %14 = arith.mulf %12, %13 : vector<256x32xf32>
    %c0_9 = arith.constant 0 : index
    %c0_10 = arith.constant 0 : index
    %15 = vector.load %arg4[%c0_9, %c0_10] : memref<32x64xf32, #tpu.memory_space<vmem>>, vector<32x64xf32>
    %cst_11 = arith.constant dense<0.000000e+00> : vector<256x64xf32>
    %16 = tpu.matmul %0, %15, %cst_11 {dimension_numbers = #tpu.dot_dimension_numbers<[1], [0], [0], [1], [0, 0, 1, 1], [], []>} : vector<256x32xf32>, vector<32x64xf32>, vector<256x64xf32> -> vector<256x64xf32>
    %c0_12 = arith.constant 0 : index
    %c0_13 = arith.constant 0 : index
    %17 = vector.load %arg5[%c0_12, %c0_13] : memref<32x64xf32, #tpu.memory_space<vmem>>, vector<32x64xf32>
    %cst_14 = arith.constant dense<0.000000e+00> : vector<256x64xf32>
    %18 = tpu.matmul %14, %17, %cst_14 {dimension_numbers = #tpu.dot_dimension_numbers<[1], [0], [0], [1], [0, 0, 1, 1], [], []>} : vector<256x32xf32>, vector<32x64xf32>, vector<256x64xf32> -> vector<256x64xf32>
    %19 = arith.addf %16, %18 : vector<256x64xf32>
    %c0_15 = arith.constant 0 : index
    %c0_16 = arith.constant 0 : index
    %20 = vector.load %arg6[%c0_15, %c0_16] : memref<1x64xf32, #tpu.memory_space<vmem>>, vector<1x64xf32>
    %21 = vector.broadcast %20 : vector<1x64xf32> to vector<256x64xf32>
    %22 = arith.addf %19, %21 : vector<256x64xf32>
    %cst_17 = arith.constant 3.000000e+00 : f32
    %23 = vector.broadcast %cst_17 : f32 to vector<256x64xf32>
    %24 = arith.addf %22, %23 : vector<256x64xf32>
    %cst_18 = arith.constant 0.000000e+00 : f32
    %cst_19 = arith.constant 6.000000e+00 : f32
    %25 = vector.broadcast %cst_18 : f32 to vector<256x64xf32>
    %26 = arith.maximumf %25, %24 : vector<256x64xf32>
    %27 = vector.broadcast %cst_19 : f32 to vector<256x64xf32>
    %28 = arith.minimumf %27, %26 : vector<256x64xf32>
    %29 = arith.mulf %22, %28 : vector<256x64xf32>
    %cst_20 = arith.constant 0.166666672 : f32
    %30 = vector.broadcast %cst_20 : f32 to vector<256x64xf32>
    %31 = arith.mulf %29, %30 : vector<256x64xf32>
    %c0_21 = arith.constant 0 : index
    %c0_22 = arith.constant 0 : index
    %32 = vector.load %arg7[%c0_21, %c0_22] : memref<256x128xf32, #tpu.memory_space<vmem>>, vector<256x32xf32>
    tpu.vector_store %arg7[%c0_21, %c0_22], %0 {strides = array<i32>} : memref<256x128xf32, #tpu.memory_space<vmem>>, vector<256x32xf32>,
    %c0_23 = arith.constant 0 : index
    %c32 = arith.constant 32 : index
    %33 = vector.load %arg7[%c0_23, %c32] : memref<256x128xf32, #tpu.memory_space<vmem>>, vector<256x32xf32>
    tpu.vector_store %arg7[%c0_23, %c32], %14 {strides = array<i32>} : memref<256x128xf32, #tpu.memory_space<vmem>>, vector<256x32xf32>,
    %c0_24 = arith.constant 0 : index
    %c64 = arith.constant 64 : index
    %34 = vector.load %arg7[%c0_24, %c64] : memref<256x128xf32, #tpu.memory_space<vmem>>, vector<256x64xf32>
    tpu.vector_store %arg7[%c0_24, %c64], %31 {strides = array<i32>} : memref<256x128xf32, #tpu.memory_space<vmem>>, vector<256x64xf32>,
    return
  }
  func.func @transform_0(%arg0: i32) -> (i32, i32) {
    %c0_i32 = arith.constant 0 : i32
    %c0_i32_0 = arith.constant 0 : i32
    return %arg0, %c0_i32 : i32, i32
  }
  func.func @transform_1(%arg0: i32) -> (i32, i32) {
    %c0_i32 = arith.constant 0 : i32
    %c0_i32_0 = arith.constant 0 : i32
    %c0_i32_1 = arith.constant 0 : i32
    return %c0_i32, %c0_i32_0 : i32, i32
  }
  func.func @transform_2(%arg0: i32) -> (i32, i32) {
    %c0_i32 = arith.constant 0 : i32
    %c0_i32_0 = arith.constant 0 : i32
    %c0_i32_1 = arith.constant 0 : i32
    return %c0_i32, %c0_i32_0 : i32, i32
  }
  func.func @transform_3(%arg0: i32) -> (i32, i32) {
    %c0_i32 = arith.constant 0 : i32
    %c0_i32_0 = arith.constant 0 : i32
    %c0_i32_1 = arith.constant 0 : i32
    return %c0_i32, %c0_i32_0 : i32, i32
  }
  func.func @transform_4(%arg0: i32) -> (i32, i32) {
    %c0_i32 = arith.constant 0 : i32
    %c0_i32_0 = arith.constant 0 : i32
    %c0_i32_1 = arith.constant 0 : i32
    return %c0_i32, %c0_i32_0 : i32, i32
  }
  func.func @transform_5(%arg0: i32) -> (i32, i32) {
    %c0_i32 = arith.constant 0 : i32
    %c0_i32_0 = arith.constant 0 : i32
    %c0_i32_1 = arith.constant 0 : i32
    return %c0_i32, %c0_i32_0 : i32, i32
  }
  func.func @transform_6(%arg0: i32) -> (i32, i32) {
    %c0_i32 = arith.constant 0 : i32
    %c0_i32_0 = arith.constant 0 : i32
    return %arg0, %c0_i32 : i32, i32
  }
}

</mosaic_0001>

<llo_original>
// kernel: tpu_custom_call.1
$region0: #{tpu_custom_call.1}
  #allocation0 [shape = 'u32[]', space=smem, size = 0x4, offset = 0x4, fixed_abs, tag = 'smem constant byte address 0x4 - core index']
  #allocation1 [shape = 'u32[144,128]{1,0:T(1,128)}', space=vmem, size = 0x12000, scoped, tag = 'internal scratch']
  %s0 = inlined_call_operand.vmem [shape: f32[512,32], index: 0, kind: input, shape index: {}]
  %s1 = inlined_call_operand.vmem [shape: f32[32,32], index: 1, kind: input, shape index: {}]
  %s2 = inlined_call_operand.vmem [shape: f32[1,32], index: 2, kind: input, shape index: {}]
  %s3 = inlined_call_operand.vmem [shape: f32[32,64], index: 3, kind: input, shape index: {}]
  %s4 = inlined_call_operand.vmem [shape: f32[32,64], index: 4, kind: input, shape index: {}]
  %s5 = inlined_call_operand.vmem [shape: f32[1,64], index: 5, kind: input, shape index: {}]
  %s6 = inlined_call_operand.hbm [shape: f32[512,128], index: 6, kind: output, shape index: {}]
  %s7 = sld [smem:[#allocation0]]
  $region57: #{tpu_custom_call.1} parent=0
    _
  %s9 = ssub.s32 1, %s7
  %s10 = scalar_select 0, %s9, %s7
  $region1: #{tpu_custom_call.1} parent=0
    #allocation2 [shape = 'u8[262144]{0}', space=vmem, size = 0x40000, scoped, tag = 'output window, operand 0']
    #allocation3 [shape = 's32[2]{0}', space=sflag, size = 0x8, scoped, tag = 'scoped memory for tpu_custom_call.1']
    %11 = vsyncpa [#allocation3], 0
    %s12 = scalar_lea.sflag [#allocation3], 1
    %13 = vsyncpa %s12, 0
    loop: start=0, step=1, limit=4
    $region2: #{tpu_custom_call.1} parent=1 // loop_pre_header
      _
    $region3: #{tpu_custom_call.1} parent=1 // loop_header
      %s15 = sphi 0, %s19
      %p16 = scmp.ge.s32.totalorder %s15, 4
      %s25 = sphi 0, %s27
      %s28 = sphi 0, %s25
      %s29 = sphi 0, %s28
      %s45 = sphi 0, %s29
      %s49 = sphi 0, %s49
      %s51 = sphi 0, %s49
      %s52 = sphi 0, %s51
      %s66 = sphi 0, %s52
      %s70 = sphi 0, %s70
      %s72 = sphi 0, %s70
      %s73 = sphi 0, %s72
      %s87 = sphi 0, %s73
      %s91 = sphi 0, %s91
      %s93 = sphi 0, %s91
      %s94 = sphi 0, %s93
      %s108 = sphi 0, %s94
      %s112 = sphi 0, %s112
      %s114 = sphi 0, %s112
      %s115 = sphi 0, %s114
      %s129 = sphi 0, %s115
      %s133 = sphi 0, %s133
      %s135 = sphi 0, %s133
      %s136 = sphi 0, %s135
      %s150 = sphi 0, %s136
      %s156 = sphi 0, %s158
      %s159 = sphi 0, %s156
      %s160 = sphi 0, %s159
      %s176 = sphi 0, %s160
    $region4: #{tpu_custom_call.1} parent=1 // loop_header_branch
      %18 = sbr.rel (%p16) target = $region8
    $region5: #{tpu_custom_call.1} parent=1 // loop_body
      %s20 = ssub.s32 %s15, 1
      %s21 = ssub.s32 %s15, 2
      %s22 = sadd.s32 %s15, 1
      %s23 = ssub.s32 %s15, %s22
      %p24 = scmp.eq.s32.totalorder %s23, 0
      %s26 = sadd.s32 %s25, 1
      %s27 = scalar_select %p24, %s25, %s26
      %p30 = pneg %p24
      %p31 = scmp.eq.s32.totalorder %s15, 1
      %p32 = por %p30, %p31
      %p33 = scmp.ne.s32.totalorder %s25, %s28
      %p34 = scmp.eq.s32.totalorder %s15, 0
      %p35 = por %p33, %p34
      %p36 = scmp.ne.s32.totalorder %s25, %s28
      %p37 = scmp.eq.s32.totalorder %s20, 1
      %p38 = por %p36, %p37
      %p39 = scmp.ne.s32.totalorder %s28, %s29
      %p40 = scmp.eq.s32.totalorder %s20, 0
      %p41 = por %p39, %p40
      %p42 = scmp.ne.s32.totalorder %s28, %s29
      %p43 = scmp.eq.s32.totalorder %s21, 1
      %p44 = por %p42, %p43
      %p46 = scmp.ne.s32.totalorder %s29, %s45
      %p47 = scmp.eq.s32.totalorder %s21, 0
      %p48 = por %p46, %p47
      %s50 = sadd.s32 %s49, 1
      %p53 = scmp.eq.s32.totalorder %s15, 1
      %p54 = scmp.ne.s32.totalorder %s49, %s51
      %p55 = scmp.eq.s32.totalorder %s15, 0
      %p56 = por %p54, %p55
      %p57 = scmp.ne.s32.totalorder %s49, %s51
      %p58 = scmp.eq.s32.totalorder %s20, 1
      %p59 = por %p57, %p58
      %p60 = scmp.ne.s32.totalorder %s51, %s52
      %p61 = scmp.eq.s32.totalorder %s20, 0
      %p62 = por %p60, %p61
      %p63 = scmp.ne.s32.totalorder %s51, %s52
      %p64 = scmp.eq.s32.totalorder %s21, 1
      %p65 = por %p63, %p64
      %p67 = scmp.ne.s32.totalorder %s52, %s66
      %p68 = scmp.eq.s32.totalorder %s21, 0
      %p69 = por %p67, %p68
      %s71 = sadd.s32 %s70, 1
      %p74 = scmp.eq.s32.totalorder %s15, 1
      %p75 = scmp.ne.s32.totalorder %s70, %s72
      %p76 = scmp.eq.s32.totalorder %s15, 0
      %p77 = por %p75, %p76
      %p78 = scmp.ne.s32.totalorder %s70, %s72
      %p79 = scmp.eq.s32.totalorder %s20, 1
      %p80 = por %p78, %p79
      %p81 = scmp.ne.s32.totalorder %s72, %s73
      %p82 = scmp.eq.s32.totalorder %s20, 0
      %p83 = por %p81, %p82
      %p84 = scmp.ne.s32.totalorder %s72, %s73
      %p85 = scmp.eq.s32.totalorder %s21, 1
      %p86 = por %p84, %p85
      %p88 = scmp.ne.s32.totalorder %s73, %s87
      %p89 = scmp.eq.s32.totalorder %s21, 0
      %p90 = por %p88, %p89
      %s92 = sadd.s32 %s91, 1
      %p95 = scmp.eq.s32.totalorder %s15, 1
      %p96 = scmp.ne.s32.totalorder %s91, %s93
      %p97 = scmp.eq.s32.totalorder %s15, 0
      %p98 = por %p96, %p97
      %p99 = scmp.ne.s32.totalorder %s91, %s93
      %p100 = scmp.eq.s32.totalorder %s20, 1
      %p101 = por %p99, %p100
      %p102 = scmp.ne.s32.totalorder %s93, %s94
      %p103 = scmp.eq.s32.totalorder %s20, 0
      %p104 = por %p102, %p103
      %p105 = scmp.ne.s32.totalorder %s93, %s94
      %p106 = scmp.eq.s32.totalorder %s21, 1
      %p107 = por %p105, %p106
      %p109 = scmp.ne.s32.totalorder %s94, %s108
      %p110 = scmp.eq.s32.totalorder %s21, 0
      %p111 = por %p109, %p110
      %s113 = sadd.s32 %s112, 1
      %p116 = scmp.eq.s32.totalorder %s15, 1
      %p117 = scmp.ne.s32.totalorder %s112, %s114
      %p118 = scmp.eq.s32.totalorder %s15, 0
      %p119 = por %p117, %p118
      %p120 = scmp.ne.s32.totalorder %s112, %s114
      %p121 = scmp.eq.s32.totalorder %s20, 1
      %p122 = por %p120, %p121
      %p123 = scmp.ne.s32.totalorder %s114, %s115
      %p124 = scmp.eq.s32.totalorder %s20, 0
      %p125 = por %p123, %p124
      %p126 = scmp.ne.s32.totalorder %s114, %s115
      %p127 = scmp.eq.s32.totalorder %s21, 1
      %p128 = por %p126, %p127
      %p130 = scmp.ne.s32.totalorder %s115, %s129
      %p131 = scmp.eq.s32.totalorder %s21, 0
      %p132 = por %p130, %p131
      %s134 = sadd.s32 %s133, 1
      %p137 = scmp.eq.s32.totalorder %s15, 1
      %p138 = scmp.ne.s32.totalorder %s133, %s135
      %p139 = scmp.eq.s32.totalorder %s15, 0
      %p140 = por %p138, %p139
      %p141 = scmp.ne.s32.totalorder %s133, %s135
      %p142 = scmp.eq.s32.totalorder %s20, 1
      %p143 = por %p141, %p142
      %p144 = scmp.ne.s32.totalorder %s135, %s136
      %p145 = scmp.eq.s32.totalorder %s20, 0
      %p146 = por %p144, %p145
      %p147 = scmp.ne.s32.totalorder %s135, %s136
      %p148 = scmp.eq.s32.totalorder %s21, 1
      %p149 = por %p147, %p148
      %p151 = scmp.ne.s32.totalorder %s136, %s150
      %p152 = scmp.eq.s32.totalorder %s21, 0
      %p153 = por %p151, %p152
      %s154 = ssub.s32 %s15, %s22
      %p155 = scmp.eq.s32.totalorder %s154, 0
      %s157 = sadd.s32 %s156, 1
      %s158 = scalar_select %p155, %s156, %s157
      %p161 = pneg %p155
      %p162 = scmp.eq.s32.totalorder %s15, 1
      %p163 = por %p161, %p162
      %p164 = scmp.ne.s32.totalorder %s156, %s159
      %p165 = scmp.eq.s32.totalorder %s15, 0
      %p166 = por %p164, %p165
      %p167 = scmp.ne.s32.totalorder %s156, %s159
      %p168 = scmp.eq.s32.totalorder %s20, 1
      %p169 = por %p167, %p168
      %p170 = scmp.ne.s32.totalorder %s159, %s160
      %p171 = scmp.eq.s32.totalorder %s20, 0
      %p172 = por %p170, %p171
      %p173 = scmp.ne.s32.totalorder %s159, %s160
      %p174 = scmp.eq.s32.totalorder %s21, 1
      %p175 = por %p173, %p174
      %p177 = scmp.ne.s32.totalorder %s160, %s176
      %p178 = scmp.eq.s32.totalorder %s21, 0
      %p179 = por %p177, %p178
      %p180 = scmp.le.s32.totalorder 1, %s15
      %p181 = scmp.lt.s32.totalorder %s15, 3
      %p182 = pnand %p180, %p181
      %p183 = pneg %p182
      // Predicated region
      $region9: #{tpu_custom_call.1} parent=5 // pred_check
        _
      $region10: #{tpu_custom_call.1} parent=5 // pred_check_branch
        %185 = sbr.rel (%p182) target = $region12
      $region11: #{tpu_custom_call.1} parent=5 // pred_region
        %s186 = ssub.s32 %s15, 1
        // Predicated region
        $region13: #{tpu_custom_call.1} parent=11 // pred_check
          %p187 = pneg %p62
        $region14: #{tpu_custom_call.1} parent=11 // pred_check_branch
          %189 = sbr.rel (%p187) target = $region16
        $region15: #{tpu_custom_call.1} parent=11 // pred_region
          _
        $region16: #{tpu_custom_call.1} parent=11 // pred_fallthru
          _
        // Predicated region
        $region17: #{tpu_custom_call.1} parent=11 // pred_check
          %p190 = pneg %p83
        $region18: #{tpu_custom_call.1} parent=11 // pred_check_branch
          %192 = sbr.rel (%p190) target = $region20
        $region19: #{tpu_custom_call.1} parent=11 // pred_region
          _
        $region20: #{tpu_custom_call.1} parent=11 // pred_fallthru
          _
        // Predicated region
        $region21: #{tpu_custom_call.1} parent=11 // pred_check
          %p193 = pneg %p104
        $region22: #{tpu_custom_call.1} parent=11 // pred_check_branch
          %195 = sbr.rel (%p193) target = $region24
        $region23: #{tpu_custom_call.1} parent=11 // pred_region
          _
        $region24: #{tpu_custom_call.1} parent=11 // pred_fallthru
          _
        // Predicated region
        $region25: #{tpu_custom_call.1} parent=11 // pred_check
          %p196 = pneg %p125
        $region26: #{tpu_custom_call.1} parent=11 // pred_check_branch
          %198 = sbr.rel (%p196) target = $region28
        $region27: #{tpu_custom_call.1} parent=11 // pred_region
          _
        $region28: #{tpu_custom_call.1} parent=11 // pred_fallthru
          _
        // Predicated region
        $region29: #{tpu_custom_call.1} parent=11 // pred_check
          %p199 = pneg %p146
        $region30: #{tpu_custom_call.1} parent=11 // pred_check_branch
          %201 = sbr.rel (%p199) target = $region32
        $region31: #{tpu_custom_call.1} parent=11 // pred_region
          _
        $region32: #{tpu_custom_call.1} parent=11 // pred_fallthru
          _
      $region12: #{tpu_custom_call.1} parent=5 // pred_fallthru
        _
      %p202 = scmp.lt.s32.totalorder %s15, 2
      // Predicated region
      $region33: #{tpu_custom_call.1} parent=5 // pred_check
        %p203 = pneg %p202
      $region34: #{tpu_custom_call.1} parent=5 // pred_check_branch
        %205 = sbr.rel (%p203) target = $region36
      $region35: #{tpu_custom_call.1} parent=5 // pred_region
        // Predicated region
        $region37: #{tpu_custom_call.1} parent=35 // pred_check
          %p206 = pneg %p35
        $region38: #{tpu_custom_call.1} parent=35 // pred_check_branch
          %208 = sbr.rel (%p206) target = $region40
        $region39: #{tpu_custom_call.1} parent=35 // pred_region
          %s209 = smul.u32 32, %s15
          %p210 = scmp.lt.s32.totalorder %s209, 63
          %s211 = scalar_select %p210, %s209, 63
          %s212 = smul.addr %s211, 8
          %s213 = scalar_lea.vmem %s0, %s212
          %s214 = smul.u32 32, %s15
        $region40: #{tpu_custom_call.1} parent=35 // pred_fallthru
          _
      $region36: #{tpu_custom_call.1} parent=5 // pred_fallthru
        _
      %p215 = scmp.le.s32.totalorder 1, %s15
      %p216 = scmp.lt.s32.totalorder %s15, 3
      %p217 = pnand %p215, %p216
      %p218 = pneg %p217
      // Predicated region
      $region41: #{tpu_custom_call.1} parent=5 // pred_check
        _
      $region42: #{tpu_custom_call.1} parent=5 // pred_check_branch
        %220 = sbr.rel (%p217) target = $region44
      $region43: #{tpu_custom_call.1} parent=5 // pred_region
        %s221 = ssub.s32 %s15, 1
        %s222 = smul.u32 32, %s20
        %p223 = scmp.lt.s32.totalorder %s222, 63
        %s224 = scalar_select %p223, %s222, 63
        %s225 = smul.addr %s224, 8
        %s226 = scalar_lea.vmem %s0, %s225
        %p227 = pneg %p41
        %p228 = pneg %p38
        %p229 = pneg %p62
        %p230 = pneg %p59
        %p231 = pneg %p83
        %p232 = pneg %p80
        %p233 = pneg %p104
        %p234 = pneg %p101
        %p235 = pneg %p125
        %p236 = pneg %p122
        %p237 = pneg %p146
        %p238 = pneg %p143
        %p239 = pneg %p172
        %p240 = pneg %p169
        %s241 = sand.u32 %s159, 1
        %s242 = scalar_lea.sflag [#allocation3], %s241
        %s243 = sand.u32 %s159, 1
        %s244 = smul.addr %s243, 256
        %s245 = scalar_lea.vmem [#allocation2], %s244
        %s246 = smul.u32 32, %s20
        %p247 = scmp.lt.s32.totalorder %s246, 63
        %s248 = scalar_select %p247, %s246, 63
        %s249 = smul.addr %s248, 8
        %s250 = scalar_lea.vmem %s0, %s249
        %s251 = smul.u32 32, %s20
        %s252 = smul.u32 32, %s20
        %v253 = vld [vmem:[%s250] sm:$0xff]
        %v254 = vld [vmem:[%s250 + $0x8] sm:$0xff]
        %v255 = vld [vmem:[%s250 + $0x10] sm:$0xff]
        %v256 = vld [vmem:[%s250 + $0x18] sm:$0xff]
        %v257 = vld [vmem:[%s250 + $0x20] sm:$0xff]
        %v258 = vld [vmem:[%s250 + $0x28] sm:$0xff]
        %v259 = vld [vmem:[%s250 + $0x30] sm:$0xff]
        %v260 = vld [vmem:[%s250 + $0x38] sm:$0xff]
        %v261 = vld [vmem:[%s250 + $0x40] sm:$0xff]
        %v262 = vld [vmem:[%s250 + $0x48] sm:$0xff]
        %v263 = vld [vmem:[%s250 + $0x50] sm:$0xff]
        %v264 = vld [vmem:[%s250 + $0x58] sm:$0xff]
        %v265 = vld [vmem:[%s250 + $0x60] sm:$0xff]
        %v266 = vld [vmem:[%s250 + $0x68] sm:$0xff]
        %v267 = vld [vmem:[%s250 + $0x70] sm:$0xff]
        %v268 = vld [vmem:[%s250 + $0x78] sm:$0xff]
        %v269 = vld [vmem:[%s250 + $0x80] sm:$0xff]
        %v270 = vld [vmem:[%s250 + $0x88] sm:$0xff]
        %v271 = vld [vmem:[%s250 + $0x90] sm:$0xff]
        %v272 = vld [vmem:[%s250 + $0x98] sm:$0xff]
        %v273 = vld [vmem:[%s250 + $0xa0] sm:$0xff]
        %v274 = vld [vmem:[%s250 + $0xa8] sm:$0xff]
        %v275 = vld [vmem:[%s250 + $0xb0] sm:$0xff]
        %v276 = vld [vmem:[%s250 + $0xb8] sm:$0xff]
        %v277 = vld [vmem:[%s250 + $0xc0] sm:$0xff]
        %v278 = vld [vmem:[%s250 + $0xc8] sm:$0xff]
        %v279 = vld [vmem:[%s250 + $0xd0] sm:$0xff]
        %v280 = vld [vmem:[%s250 + $0xd8] sm:$0xff]
        %v281 = vld [vmem:[%s250 + $0xe0] sm:$0xff]
        %v282 = vld [vmem:[%s250 + $0xe8] sm:$0xff]
        %v283 = vld [vmem:[%s250 + $0xf0] sm:$0xff]
        %v284 = vld [vmem:[%s250 + $0xf8] sm:$0xff]
        %v285 = vld [vmem:[%s1] sm:$0xff]
        %v286 = vld [vmem:[%s1 + $0x8] sm:$0xff]
        %v287 = vld [vmem:[%s1 + $0x10] sm:$0xff]
        %v288 = vld [vmem:[%s1 + $0x18] sm:$0xff]
        %v289 = vld [vmem:[%s2] sm:$0x1]
        %v291 = vlaneseq
        %v292 = vshrl.u32 %v291, 7
        %v293 = vsub.s32 0, %v292
        %v294 = vrot.slane %v289, %v293
        %vm296 = vcmask 261120
        %v298 = vsel %vm296, %v253, 0
        %v301 = vsel %vm296, %v254, 0
        %v304 = vsel %vm296, %v255, 0
        %v307 = vsel %vm296, %v256, 0
        %v310 = vsel %vm296, %v257, 0
        %v313 = vsel %vm296, %v258, 0
        %v316 = vsel %vm296, %v259, 0
        %v319 = vsel %vm296, %v260, 0
        %v322 = vsel %vm296, %v261, 0
        %v325 = vsel %vm296, %v262, 0
        %v328 = vsel %vm296, %v263, 0
        %v331 = vsel %vm296, %v264, 0
        %v334 = vsel %vm296, %v265, 0
        %v337 = vsel %vm296, %v266, 0
        %v340 = vsel %vm296, %v267, 0
        %v343 = vsel %vm296, %v268, 0
        %v346 = vsel %vm296, %v269, 0
        %v349 = vsel %vm296, %v270, 0
        %v352 = vsel %vm296, %v271, 0
        %v355 = vsel %vm296, %v272, 0
        %v358 = vsel %vm296, %v273, 0
        %v361 = vsel %vm296, %v274, 0
        %v364 = vsel %vm296, %v275, 0
        %v367 = vsel %vm296, %v276, 0
        %v370 = vsel %vm296, %v277, 0
        %v373 = vsel %vm296, %v278, 0
        %v376 = vsel %vm296, %v279, 0
        %v379 = vsel %vm296, %v280, 0
        %v382 = vsel %vm296, %v281, 0
        %v385 = vsel %vm296, %v282, 0
        %v388 = vsel %vm296, %v283, 0
        %v391 = vsel %vm296, %v284, 0
        %393 = vmatprep.subr.mxu0 0.0
        %394 = vmatpush1.msra.mxu0 0.0
        %395 = vmatprep.subr.mxu0 0.0
        %396 = vmatpush1.msra.mxu0 0.0
        %397 = vmatprep.subr.mxu0 0.0
        %398 = vmatpush1.msra.mxu0 0.0
        %399 = vmatprep.subr.mxu0 0.0
        %400 = vmatpush1.msra.mxu0 0.0
        %401 = vmatprep.subr.mxu0 0.0
        %402 = vmatpush1.msra.mxu0 0.0
        %403 = vmatprep.subr.mxu0 0.0
        %404 = vmatpush1.msra.mxu0 0.0
        %405 = vmatprep.subr.mxu0 0.0
        %406 = vmatpush1.msra.mxu0 0.0
        %407 = vmatprep.subr.mxu0 0.0
        %408 = vmatpush1.msra.mxu0 0.0
        %409 = vmatprep.subr.mxu0 0.0
        %410 = vmatpush1.msra.mxu0 0.0
        %411 = vmatprep.subr.mxu0 0.0
        %412 = vmatpush1.msra.mxu0 0.0
        %413 = vmatprep.subr.mxu0 0.0
        %414 = vmatpush1.msra.mxu0 0.0
        %415 = vmatprep.subr.mxu0 0.0
        %416 = vmatpush1.msra.mxu0 0.0
        %417 = vmatprep.subr.mxu0 0.0
        %418 = vmatpush1.msra.mxu0 %v288
        %419 = vmatprep.subr.mxu0 0.0
        %420 = vmatpush1.msra.mxu0 %v287
        %421 = vmatprep.subr.mxu0 0.0
        %422 = vmatpush1.msra.mxu0 %v286
        %423 = vmatprep.subr.mxu0 0.0
        %424 = vmatpush1.msra.mxu0 %v285
        %425 = vmatprep.subr.mxu0 0.0
        %426 = vmatpush2.msra.mxu0 0.0
        %427 = vmatprep.subr.mxu0 0.0
        %428 = vmatpush2.msra.mxu0 0.0
        %429 = vmatprep.subr.mxu0 0.0
        %430 = vmatpush2.msra.mxu0 0.0
        %431 = vmatprep.subr.mxu0 0.0
        %432 = vmatpush2.msra.mxu0 0.0
        %433 = vmatprep.subr.mxu0 0.0
        %434 = vmatpush2.msra.mxu0 0.0
        %435 = vmatprep.subr.mxu0 0.0
        %436 = vmatpush2.msra.mxu0 0.0
        %437 = vmatprep.subr.mxu0 0.0
        %438 = vmatpush2.msra.mxu0 0.0
        %439 = vmatprep.subr.mxu0 0.0
        %440 = vmatpush2.msra.mxu0 0.0
        %441 = vmatprep.subr.mxu0 0.0
        %442 = vmatpush2.msra.mxu0 0.0
        %443 = vmatprep.subr.mxu0 0.0
        %444 = vmatpush2.msra.mxu0 0.0
        %445 = vmatprep.subr.mxu0 0.0
        %446 = vmatpush2.msra.mxu0 0.0
        %447 = vmatprep.subr.mxu0 0.0
        %448 = vmatpush2.msra.mxu0 0.0
        %449 = vmatprep.subr.mxu0 0.0
        %450 = vmatpush2.msra.mxu0 0.0
        %451 = vmatprep.subr.mxu0 0.0
        %452 = vmatpush2.msra.mxu0 0.0
        %453 = vmatprep.subr.mxu0 0.0
        %454 = vmatpush2.msra.mxu0 0.0
        %455 = vmatprep.subr.mxu0 0.0
        %456 = vmatpush2.msra.mxu0 0.0
        %457 = vmatprep.mubr.f32.mxu0 0.0
        %458 = vmatmul.mubr.f32.gmra.mxu0 %v298
        %v459 = vpop.f32.mrf.mxu0
        %v460 = vadd.f32 %v294, %v459
        %v461 = vpop.f32.mrf.mxu0
        %462 = vmatprep.mubr.f32.mxu0 0.0
        %463 = vmatmul.mubr.f32.gmra.mxu0 %v301
        %v464 = vpop.f32.mrf.mxu0
        %v465 = vadd.f32 %v294, %v464
        %v466 = vpop.f32.mrf.mxu0
        %467 = vmatprep.mubr.f32.mxu0 0.0
        %468 = vmatmul.mubr.f32.gmra.mxu0 %v304
        %v469 = vpop.f32.mrf.mxu0
        %v470 = vadd.f32 %v294, %v469
        %v471 = vpop.f32.mrf.mxu0
        %472 = vmatprep.mubr.f32.mxu0 0.0
        %473 = vmatmul.mubr.f32.gmra.mxu0 %v307
        %v474 = vpop.f32.mrf.mxu0
        %v475 = vadd.f32 %v294, %v474
        %v476 = vpop.f32.mrf.mxu0
        %477 = vmatprep.mubr.f32.mxu0 0.0
        %478 = vmatmul.mubr.f32.gmra.mxu0 %v310
        %v479 = vpop.f32.mrf.mxu0
        %v480 = vadd.f32 %v294, %v479
        %v481 = vpop.f32.mrf.mxu0
        %482 = vmatprep.mubr.f32.mxu0 0.0
        %483 = vmatmul.mubr.f32.gmra.mxu0 %v313
        %v484 = vpop.f32.mrf.mxu0
        %v485 = vadd.f32 %v294, %v484
        %v486 = vpop.f32.mrf.mxu0
        %487 = vmatprep.mubr.f32.mxu0 0.0
        %488 = vmatmul.mubr.f32.gmra.mxu0 %v316
        %v489 = vpop.f32.mrf.mxu0
        %v490 = vadd.f32 %v294, %v489
        %v491 = vpop.f32.mrf.mxu0
        %492 = vmatprep.mubr.f32.mxu0 0.0
        %493 = vmatmul.mubr.f32.gmra.mxu0 %v319
        %v494 = vpop.f32.mrf.mxu0
        %v495 = vadd.f32 %v294, %v494
        %v496 = vpop.f32.mrf.mxu0
        %497 = vmatprep.mubr.f32.mxu0 0.0
        %498 = vmatmul.mubr.f32.gmra.mxu0 %v322
        %v499 = vpop.f32.mrf.mxu0
        %v500 = vadd.f32 %v294, %v499
        %v501 = vpop.f32.mrf.mxu0
        %502 = vmatprep.mubr.f32.mxu0 0.0
        %503 = vmatmul.mubr.f32.gmra.mxu0 %v325
        %v504 = vpop.f32.mrf.mxu0
        %v505 = vadd.f32 %v294, %v504
        %v506 = vpop.f32.mrf.mxu0
        %507 = vmatprep.mubr.f32.mxu0 0.0
        %508 = vmatmul.mubr.f32.gmra.mxu0 %v328
        %v509 = vpop.f32.mrf.mxu0
        %v510 = vadd.f32 %v294, %v509
        %v511 = vpop.f32.mrf.mxu0
        %512 = vmatprep.mubr.f32.mxu0 0.0
        %513 = vmatmul.mubr.f32.gmra.mxu0 %v331
        %v514 = vpop.f32.mrf.mxu0
        %v515 = vadd.f32 %v294, %v514
        %v516 = vpop.f32.mrf.mxu0
        %517 = vmatprep.mubr.f32.mxu0 0.0
        %518 = vmatmul.mubr.f32.gmra.mxu0 %v334
        %v519 = vpop.f32.mrf.mxu0
        %v520 = vadd.f32 %v294, %v519
        %v521 = vpop.f32.mrf.mxu0
        %522 = vmatprep.mubr.f32.mxu0 0.0
        %523 = vmatmul.mubr.f32.gmra.mxu0 %v337
        %v524 = vpop.f32.mrf.mxu0
        %v525 = vadd.f32 %v294, %v524
        %v526 = vpop.f32.mrf.mxu0
        %527 = vmatprep.mubr.f32.mxu0 0.0
        %528 = vmatmul.mubr.f32.gmra.mxu0 %v340
        %v529 = vpop.f32.mrf.mxu0
        %v530 = vadd.f32 %v294, %v529
        %v531 = vpop.f32.mrf.mxu0
        %532 = vmatprep.mubr.f32.mxu0 0.0
        %533 = vmatmul.mubr.f32.gmra.mxu0 %v343
        %v534 = vpop.f32.mrf.mxu0
        %v535 = vadd.f32 %v294, %v534
        %v536 = vpop.f32.mrf.mxu0
        %537 = vmatprep.mubr.f32.mxu0 0.0
        %538 = vmatmul.mubr.f32.gmra.mxu0 %v346
        %v539 = vpop.f32.mrf.mxu0
        %v540 = vadd.f32 %v294, %v539
        %v541 = vpop.f32.mrf.mxu0
        %542 = vmatprep.mubr.f32.mxu0 0.0
        %543 = vmatmul.mubr.f32.gmra.mxu0 %v349
        %v544 = vpop.f32.mrf.mxu0
        %v545 = vadd.f32 %v294, %v544
        %v546 = vpop.f32.mrf.mxu0
        %547 = vmatprep.mubr.f32.mxu0 0.0
        %548 = vmatmul.mubr.f32.gmra.mxu0 %v352
        %v549 = vpop.f32.mrf.mxu0
        %v550 = vadd.f32 %v294, %v549
        %v551 = vpop.f32.mrf.mxu0
        %552 = vmatprep.mubr.f32.mxu0 0.0
        %553 = vmatmul.mubr.f32.gmra.mxu0 %v355
        %v554 = vpop.f32.mrf.mxu0
        %v555 = vadd.f32 %v294, %v554
        %v556 = vpop.f32.mrf.mxu0
        %557 = vmatprep.mubr.f32.mxu0 0.0
        %558 = vmatmul.mubr.f32.gmra.mxu0 %v358
        %v559 = vpop.f32.mrf.mxu0
        %v560 = vadd.f32 %v294, %v559
        %v561 = vpop.f32.mrf.mxu0
        %562 = vmatprep.mubr.f32.mxu0 0.0
        %563 = vmatmul.mubr.f32.gmra.mxu0 %v361
        %v564 = vpop.f32.mrf.mxu0
        %v565 = vadd.f32 %v294, %v564
        %v566 = vpop.f32.mrf.mxu0
        %567 = vmatprep.mubr.f32.mxu0 0.0
        %568 = vmatmul.mubr.f32.gmra.mxu0 %v364
        %v569 = vpop.f32.mrf.mxu0
        %v570 = vadd.f32 %v294, %v569
        %v571 = vpop.f32.mrf.mxu0
        %572 = vmatprep.mubr.f32.mxu0 0.0
        %573 = vmatmul.mubr.f32.gmra.mxu0 %v367
        %v574 = vpop.f32.mrf.mxu0
        %v575 = vadd.f32 %v294, %v574
        %v576 = vpop.f32.mrf.mxu0
        %577 = vmatprep.mubr.f32.mxu0 0.0
        %578 = vmatmul.mubr.f32.gmra.mxu0 %v370
        %v579 = vpop.f32.mrf.mxu0
        %v580 = vadd.f32 %v294, %v579
        %v581 = vpop.f32.mrf.mxu0
        %582 = vmatprep.mubr.f32.mxu0 0.0
        %583 = vmatmul.mubr.f32.gmra.mxu0 %v373
        %v584 = vpop.f32.mrf.mxu0
        %v585 = vadd.f32 %v294, %v584
        %v586 = vpop.f32.mrf.mxu0
        %587 = vmatprep.mubr.f32.mxu0 0.0
        %588 = vmatmul.mubr.f32.gmra.mxu0 %v376
        %v589 = vpop.f32.mrf.mxu0
        %v590 = vadd.f32 %v294, %v589
        %v591 = vpop.f32.mrf.mxu0
        %592 = vmatprep.mubr.f32.mxu0 0.0
        %593 = vmatmul.mubr.f32.gmra.mxu0 %v379
        %v594 = vpop.f32.mrf.mxu0
        %v595 = vadd.f32 %v294, %v594
        %v596 = vpop.f32.mrf.mxu0
        %597 = vmatprep.mubr.f32.mxu0 0.0
        %598 = vmatmul.mubr.f32.gmra.mxu0 %v382
        %v599 = vpop.f32.mrf.mxu0
        %v600 = vadd.f32 %v294, %v599
        %v601 = vpop.f32.mrf.mxu0
        %602 = vmatprep.mubr.f32.mxu0 0.0
        %603 = vmatmul.mubr.f32.gmra.mxu0 %v385
        %v604 = vpop.f32.mrf.mxu0
        %v605 = vadd.f32 %v294, %v604
        %v606 = vpop.f32.mrf.mxu0
        %607 = vmatprep.mubr.f32.mxu0 0.0
        %608 = vmatmul.mubr.f32.gmra.mxu0 %v388
        %v609 = vpop.f32.mrf.mxu0
        %v610 = vadd.f32 %v294, %v609
        %v611 = vpop.f32.mrf.mxu0
        %612 = vmatprep.mubr.f32.mxu0 0.0
        %613 = vmatmul.mubr.f32.gmra.mxu0 %v391
        %v614 = vpop.f32.mrf.mxu0
        %v615 = vadd.f32 %v294, %v614
        %v616 = vpop.f32.mrf.mxu0
        %617 = vdwg.mxu0
        %v618 = vadd.f32 %v460, 3.0
        %v619 = vadd.f32 %v465, 3.0
        %v620 = vadd.f32 %v470, 3.0
        %v621 = vadd.f32 %v475, 3.0
        %v622 = vadd.f32 %v480, 3.0
        %v623 = vadd.f32 %v485, 3.0
        %v624 = vadd.f32 %v490, 3.0
        %v625 = vadd.f32 %v495, 3.0
        %v626 = vadd.f32 %v500, 3.0
        %v627 = vadd.f32 %v505, 3.0
        %v628 = vadd.f32 %v510, 3.0
        %v629 = vadd.f32 %v515, 3.0
        %v630 = vadd.f32 %v520, 3.0
        %v631 = vadd.f32 %v525, 3.0
        %v632 = vadd.f32 %v530, 3.0
        %v633 = vadd.f32 %v535, 3.0
        %v634 = vadd.f32 %v540, 3.0
        %v635 = vadd.f32 %v545, 3.0
        %v636 = vadd.f32 %v550, 3.0
        %v637 = vadd.f32 %v555, 3.0
        %v638 = vadd.f32 %v560, 3.0
        %v639 = vadd.f32 %v565, 3.0
        %v640 = vadd.f32 %v570, 3.0
        %v641 = vadd.f32 %v575, 3.0
        %v642 = vadd.f32 %v580, 3.0
        %v643 = vadd.f32 %v585, 3.0
        %v644 = vadd.f32 %v590, 3.0
        %v645 = vadd.f32 %v595, 3.0
        %v646 = vadd.f32 %v600, 3.0
        %v647 = vadd.f32 %v605, 3.0
        %v648 = vadd.f32 %v610, 3.0
        %v649 = vadd.f32 %v615, 3.0
        %v650 = vmax.f32 %v618, 0.0
        %v651 = vmax.f32 %v619, 0.0
        %v652 = vmax.f32 %v620, 0.0
        %v653 = vmax.f32 %v621, 0.0
        %v654 = vmax.f32 %v622, 0.0
        %v655 = vmax.f32 %v623, 0.0
        %v656 = vmax.f32 %v624, 0.0
        %v657 = vmax.f32 %v625, 0.0
        %v658 = vmax.f32 %v626, 0.0
        %v659 = vmax.f32 %v627, 0.0
        %v660 = vmax.f32 %v628, 0.0
        %v661 = vmax.f32 %v629, 0.0
        %v662 = vmax.f32 %v630, 0.0
        %v663 = vmax.f32 %v631, 0.0
        %v664 = vmax.f32 %v632, 0.0
        %v665 = vmax.f32 %v633, 0.0
        %v666 = vmax.f32 %v634, 0.0
        %v667 = vmax.f32 %v635, 0.0
        %v668 = vmax.f32 %v636, 0.0
        %v669 = vmax.f32 %v637, 0.0
        %v670 = vmax.f32 %v638, 0.0
        %v671 = vmax.f32 %v639, 0.0
        %v672 = vmax.f32 %v640, 0.0
        %v673 = vmax.f32 %v641, 0.0
        %v674 = vmax.f32 %v642, 0.0
        %v675 = vmax.f32 %v643, 0.0
        %v676 = vmax.f32 %v644, 0.0
        %v677 = vmax.f32 %v645, 0.0
        %v678 = vmax.f32 %v646, 0.0
        %v679 = vmax.f32 %v647, 0.0
        %v680 = vmax.f32 %v648, 0.0
        %v681 = vmax.f32 %v649, 0.0
        %v682 = vmin.f32 %v650, 6.0
        %v683 = vmin.f32 %v651, 6.0
        %v684 = vmin.f32 %v652, 6.0
        %v685 = vmin.f32 %v653, 6.0
        %v686 = vmin.f32 %v654, 6.0
        %v687 = vmin.f32 %v655, 6.0
        %v688 = vmin.f32 %v656, 6.0
        %v689 = vmin.f32 %v657, 6.0
        %v690 = vmin.f32 %v658, 6.0
        %v691 = vmin.f32 %v659, 6.0
        %v692 = vmin.f32 %v660, 6.0
        %v693 = vmin.f32 %v661, 6.0
        %v694 = vmin.f32 %v662, 6.0
        %v695 = vmin.f32 %v663, 6.0
        %v696 = vmin.f32 %v664, 6.0
        %v697 = vmin.f32 %v665, 6.0
        %v698 = vmin.f32 %v666, 6.0
        %v699 = vmin.f32 %v667, 6.0
        %v700 = vmin.f32 %v668, 6.0
        %v701 = vmin.f32 %v669, 6.0
        %v702 = vmin.f32 %v670, 6.0
        %v703 = vmin.f32 %v671, 6.0
        %v704 = vmin.f32 %v672, 6.0
        %v705 = vmin.f32 %v673, 6.0
        %v706 = vmin.f32 %v674, 6.0
        %v707 = vmin.f32 %v675, 6.0
        %v708 = vmin.f32 %v676, 6.0
        %v709 = vmin.f32 %v677, 6.0
        %v710 = vmin.f32 %v678, 6.0
        %v711 = vmin.f32 %v679, 6.0
        %v712 = vmin.f32 %v680, 6.0
        %v713 = vmin.f32 %v681, 6.0
        %v714 = vmul.f32 %v460, %v682
        %v715 = vmul.f32 %v465, %v683
        %v716 = vmul.f32 %v470, %v684
        %v717 = vmul.f32 %v475, %v685
        %v718 = vmul.f32 %v480, %v686
        %v719 = vmul.f32 %v485, %v687
        %v720 = vmul.f32 %v490, %v688
        %v721 = vmul.f32 %v495, %v689
        %v722 = vmul.f32 %v500, %v690
        %v723 = vmul.f32 %v505, %v691
        %v724 = vmul.f32 %v510, %v692
        %v725 = vmul.f32 %v515, %v693
        %v726 = vmul.f32 %v520, %v694
        %v727 = vmul.f32 %v525, %v695
        %v728 = vmul.f32 %v530, %v696
        %v729 = vmul.f32 %v535, %v697
        %v730 = vmul.f32 %v540, %v698
        %v731 = vmul.f32 %v545, %v699
        %v732 = vmul.f32 %v550, %v700
        %v733 = vmul.f32 %v555, %v701
        %v734 = vmul.f32 %v560, %v702
        %v735 = vmul.f32 %v565, %v703
        %v736 = vmul.f32 %v570, %v704
        %v737 = vmul.f32 %v575, %v705
        %v738 = vmul.f32 %v580, %v706
        %v739 = vmul.f32 %v585, %v707
        %v740 = vmul.f32 %v590, %v708
        %v741 = vmul.f32 %v595, %v709
        %v742 = vmul.f32 %v600, %v710
        %v743 = vmul.f32 %v605, %v711
        %v744 = vmul.f32 %v610, %v712
        %v745 = vmul.f32 %v615, %v713
        %v746 = vmul.f32 %v714, 0.16666667
        %v747 = vmul.f32 %v715, 0.16666667
        %v748 = vmul.f32 %v716, 0.16666667
        %v749 = vmul.f32 %v717, 0.16666667
        %v750 = vmul.f32 %v718, 0.16666667
        %v751 = vmul.f32 %v719, 0.16666667
        %v752 = vmul.f32 %v720, 0.16666667
        %v753 = vmul.f32 %v721, 0.16666667
        %v754 = vmul.f32 %v722, 0.16666667
        %v755 = vmul.f32 %v723, 0.16666667
        %v756 = vmul.f32 %v724, 0.16666667
        %v757 = vmul.f32 %v725, 0.16666667
        %v758 = vmul.f32 %v726, 0.16666667
        %v759 = vmul.f32 %v727, 0.16666667
        %v760 = vmul.f32 %v728, 0.16666667
        %v761 = vmul.f32 %v729, 0.16666667
        %v762 = vmul.f32 %v730, 0.16666667
        %v763 = vmul.f32 %v731, 0.16666667
        %v764 = vmul.f32 %v732, 0.16666667
        %v765 = vmul.f32 %v733, 0.16666667
        %v766 = vmul.f32 %v734, 0.16666667
        %v767 = vmul.f32 %v735, 0.16666667
        %v768 = vmul.f32 %v736, 0.16666667
        %v769 = vmul.f32 %v737, 0.16666667
        %v770 = vmul.f32 %v738, 0.16666667
        %v771 = vmul.f32 %v739, 0.16666667
        %v772 = vmul.f32 %v740, 0.16666667
        %v773 = vmul.f32 %v741, 0.16666667
        %v774 = vmul.f32 %v742, 0.16666667
        %v775 = vmul.f32 %v743, 0.16666667
        %v776 = vmul.f32 %v744, 0.16666667
        %v777 = vmul.f32 %v745, 0.16666667
        %v778 = vld [vmem:[%s3] sm:$0xff]
        %v779 = vld [vmem:[%s3 + $0x8] sm:$0xff]
        %v780 = vld [vmem:[%s3 + $0x10] sm:$0xff]
        %v781 = vld [vmem:[%s3 + $0x18] sm:$0xff]
        %v782 = vld [vmem:[%s4] sm:$0xff]
        %v783 = vld [vmem:[%s4 + $0x8] sm:$0xff]
        %v784 = vld [vmem:[%s4 + $0x10] sm:$0xff]
        %v785 = vld [vmem:[%s4 + $0x18] sm:$0xff]
        %v787 = vsel %vm296, %v746, 0
        %v790 = vsel %vm296, %v747, 0
        %v793 = vsel %vm296, %v748, 0
        %v796 = vsel %vm296, %v749, 0
        %v799 = vsel %vm296, %v750, 0
        %v802 = vsel %vm296, %v751, 0
        %v805 = vsel %vm296, %v752, 0
        %v808 = vsel %vm296, %v753, 0
        %v811 = vsel %vm296, %v754, 0
        %v814 = vsel %vm296, %v755, 0
        %v817 = vsel %vm296, %v756, 0
        %v820 = vsel %vm296, %v757, 0
        %v823 = vsel %vm296, %v758, 0
        %v826 = vsel %vm296, %v759, 0
        %v829 = vsel %vm296, %v760, 0
        %v832 = vsel %vm296, %v761, 0
        %v835 = vsel %vm296, %v762, 0
        %v838 = vsel %vm296, %v763, 0
        %v841 = vsel %vm296, %v764, 0
        %v844 = vsel %vm296, %v765, 0
        %v847 = vsel %vm296, %v766, 0
        %v850 = vsel %vm296, %v767, 0
        %v853 = vsel %vm296, %v768, 0
        %v856 = vsel %vm296, %v769, 0
        %v859 = vsel %vm296, %v770, 0
        %v862 = vsel %vm296, %v771, 0
        %v865 = vsel %vm296, %v772, 0
        %v868 = vsel %vm296, %v773, 0
        %v871 = vsel %vm296, %v774, 0
        %v874 = vsel %vm296, %v775, 0
        %v877 = vsel %vm296, %v776, 0
        %v880 = vsel %vm296, %v777, 0
        %882 = vmatprep.subr.mxu0 0.0
        %883 = vmatpush1.msra.mxu0 0.0
        %884 = vmatprep.subr.mxu0 0.0
        %885 = vmatpush1.msra.mxu0 0.0
        %886 = vmatprep.subr.mxu0 0.0
        %887 = vmatpush1.msra.mxu0 0.0
        %888 = vmatprep.subr.mxu0 0.0
        %889 = vmatpush1.msra.mxu0 0.0
        %890 = vmatprep.subr.mxu0 0.0
        %891 = vmatpush1.msra.mxu0 0.0
        %892 = vmatprep.subr.mxu0 0.0
        %893 = vmatpush1.msra.mxu0 0.0
        %894 = vmatprep.subr.mxu0 0.0
        %895 = vmatpush1.msra.mxu0 0.0
        %896 = vmatprep.subr.mxu0 0.0
        %897 = vmatpush1.msra.mxu0 0.0
        %898 = vmatprep.subr.mxu0 0.0
        %899 = vmatpush1.msra.mxu0 0.0
        %900 = vmatprep.subr.mxu0 0.0
        %901 = vmatpush1.msra.mxu0 0.0
        %902 = vmatprep.subr.mxu0 0.0
        %903 = vmatpush1.msra.mxu0 0.0
        %904 = vmatprep.subr.mxu0 0.0
        %905 = vmatpush1.msra.mxu0 0.0
        %906 = vmatprep.subr.mxu0 0.0
        %907 = vmatpush1.msra.mxu0 %v785
        %908 = vmatprep.subr.mxu0 0.0
        %909 = vmatpush1.msra.mxu0 %v784
        %910 = vmatprep.subr.mxu0 0.0
        %911 = vmatpush1.msra.mxu0 %v783
        %912 = vmatprep.subr.mxu0 0.0
        %913 = vmatpush1.msra.mxu0 %v782
        %914 = vmatprep.subr.mxu0 0.0
        %915 = vmatpush2.msra.mxu0 0.0
        %916 = vmatprep.subr.mxu0 0.0
        %917 = vmatpush2.msra.mxu0 0.0
        %918 = vmatprep.subr.mxu0 0.0
        %919 = vmatpush2.msra.mxu0 0.0
        %920 = vmatprep.subr.mxu0 0.0
        %921 = vmatpush2.msra.mxu0 0.0
        %922 = vmatprep.subr.mxu0 0.0
        %923 = vmatpush2.msra.mxu0 0.0
        %924 = vmatprep.subr.mxu0 0.0
        %925 = vmatpush2.msra.mxu0 0.0
        %926 = vmatprep.subr.mxu0 0.0
        %927 = vmatpush2.msra.mxu0 0.0
        %928 = vmatprep.subr.mxu0 0.0
        %929 = vmatpush2.msra.mxu0 0.0
        %930 = vmatprep.subr.mxu0 0.0
        %931 = vmatpush2.msra.mxu0 0.0
        %932 = vmatprep.subr.mxu0 0.0
        %933 = vmatpush2.msra.mxu0 0.0
        %934 = vmatprep.subr.mxu0 0.0
        %935 = vmatpush2.msra.mxu0 0.0
        %936 = vmatprep.subr.mxu0 0.0
        %937 = vmatpush2.msra.mxu0 0.0
        %938 = vmatprep.subr.mxu0 0.0
        %939 = vmatpush2.msra.mxu0 0.0
        %940 = vmatprep.subr.mxu0 0.0
        %941 = vmatpush2.msra.mxu0 0.0
        %942 = vmatprep.subr.mxu0 0.0
        %943 = vmatpush2.msra.mxu0 0.0
        %944 = vmatprep.subr.mxu0 0.0
        %945 = vmatpush2.msra.mxu0 0.0
        %946 = vmatprep.mubr.f32.mxu0 0.0
        %947 = vmatmul.mubr.f32.gmra.mxu0 %v787
        %v948 = vpop.f32.mrf.mxu0
        %v949 = vadd.f32 0.0, %v948
        %v950 = vpop.f32.mrf.mxu0
        %951 = vmatprep.mubr.f32.mxu0 0.0
        %952 = vmatmul.mubr.f32.gmra.mxu0 %v790
        %v953 = vpop.f32.mrf.mxu0
        %v954 = vadd.f32 0.0, %v953
        %v955 = vpop.f32.mrf.mxu0
        %956 = vmatprep.mubr.f32.mxu0 0.0
        %957 = vmatmul.mubr.f32.gmra.mxu0 %v793
        %v958 = vpop.f32.mrf.mxu0
        %v959 = vadd.f32 0.0, %v958
        %v960 = vpop.f32.mrf.mxu0
        %961 = vmatprep.mubr.f32.mxu0 0.0
        %962 = vmatmul.mubr.f32.gmra.mxu0 %v796
        %v963 = vpop.f32.mrf.mxu0
        %v964 = vadd.f32 0.0, %v963
        %v965 = vpop.f32.mrf.mxu0
        %966 = vmatprep.mubr.f32.mxu0 0.0
        %967 = vmatmul.mubr.f32.gmra.mxu0 %v799
        %v968 = vpop.f32.mrf.mxu0
        %v969 = vadd.f32 0.0, %v968
        %v970 = vpop.f32.mrf.mxu0
        %971 = vmatprep.mubr.f32.mxu0 0.0
        %972 = vmatmul.mubr.f32.gmra.mxu0 %v802
        %v973 = vpop.f32.mrf.mxu0
        %v974 = vadd.f32 0.0, %v973
        %v975 = vpop.f32.mrf.mxu0
        %976 = vmatprep.mubr.f32.mxu0 0.0
        %977 = vmatmul.mubr.f32.gmra.mxu0 %v805
        %v978 = vpop.f32.mrf.mxu0
        %v979 = vadd.f32 0.0, %v978
        %v980 = vpop.f32.mrf.mxu0
        %981 = vmatprep.mubr.f32.mxu0 0.0
        %982 = vmatmul.mubr.f32.gmra.mxu0 %v808
        %v983 = vpop.f32.mrf.mxu0
        %v984 = vadd.f32 0.0, %v983
        %v985 = vpop.f32.mrf.mxu0
        %986 = vmatprep.mubr.f32.mxu0 0.0
        %987 = vmatmul.mubr.f32.gmra.mxu0 %v811
        %v988 = vpop.f32.mrf.mxu0
        %v989 = vadd.f32 0.0, %v988
        %v990 = vpop.f32.mrf.mxu0
        %991 = vmatprep.mubr.f32.mxu0 0.0
        %992 = vmatmul.mubr.f32.gmra.mxu0 %v814
        %v993 = vpop.f32.mrf.mxu0
        %v994 = vadd.f32 0.0, %v993
        %v995 = vpop.f32.mrf.mxu0
        %996 = vmatprep.mubr.f32.mxu0 0.0
        %997 = vmatmul.mubr.f32.gmra.mxu0 %v817
        %v998 = vpop.f32.mrf.mxu0
        %v999 = vadd.f32 0.0, %v998
        %v1000 = vpop.f32.mrf.mxu0
        %1001 = vmatprep.mubr.f32.mxu0 0.0
        %1002 = vmatmul.mubr.f32.gmra.mxu0 %v820
        %v1003 = vpop.f32.mrf.mxu0
        %v1004 = vadd.f32 0.0, %v1003
        %v1005 = vpop.f32.mrf.mxu0
        %1006 = vmatprep.mubr.f32.mxu0 0.0
        %1007 = vmatmul.mubr.f32.gmra.mxu0 %v823
        %v1008 = vpop.f32.mrf.mxu0
        %v1009 = vadd.f32 0.0, %v1008
        %v1010 = vpop.f32.mrf.mxu0
        %1011 = vmatprep.mubr.f32.mxu0 0.0
        %1012 = vmatmul.mubr.f32.gmra.mxu0 %v826
        %v1013 = vpop.f32.mrf.mxu0
        %v1014 = vadd.f32 0.0, %v1013
        %v1015 = vpop.f32.mrf.mxu0
        %1016 = vmatprep.mubr.f32.mxu0 0.0
        %1017 = vmatmul.mubr.f32.gmra.mxu0 %v829
        %v1018 = vpop.f32.mrf.mxu0
        %v1019 = vadd.f32 0.0, %v1018
        %v1020 = vpop.f32.mrf.mxu0
        %1021 = vmatprep.mubr.f32.mxu0 0.0
        %1022 = vmatmul.mubr.f32.gmra.mxu0 %v832
        %v1023 = vpop.f32.mrf.mxu0
        %v1024 = vadd.f32 0.0, %v1023
        %v1025 = vpop.f32.mrf.mxu0
        %1026 = vmatprep.mubr.f32.mxu0 0.0
        %1027 = vmatmul.mubr.f32.gmra.mxu0 %v835
        %v1028 = vpop.f32.mrf.mxu0
        %v1029 = vadd.f32 0.0, %v1028
        %v1030 = vpop.f32.mrf.mxu0
        %1031 = vmatprep.mubr.f32.mxu0 0.0
        %1032 = vmatmul.mubr.f32.gmra.mxu0 %v838
        %v1033 = vpop.f32.mrf.mxu0
        %v1034 = vadd.f32 0.0, %v1033
        %v1035 = vpop.f32.mrf.mxu0
        %1036 = vmatprep.mubr.f32.mxu0 0.0
        %1037 = vmatmul.mubr.f32.gmra.mxu0 %v841
        %v1038 = vpop.f32.mrf.mxu0
        %v1039 = vadd.f32 0.0, %v1038
        %v1040 = vpop.f32.mrf.mxu0
        %1041 = vmatprep.mubr.f32.mxu0 0.0
        %1042 = vmatmul.mubr.f32.gmra.mxu0 %v844
        %v1043 = vpop.f32.mrf.mxu0
        %v1044 = vadd.f32 0.0, %v1043
        %v1045 = vpop.f32.mrf.mxu0
        %1046 = vmatprep.mubr.f32.mxu0 0.0
        %1047 = vmatmul.mubr.f32.gmra.mxu0 %v847
        %v1048 = vpop.f32.mrf.mxu0
        %v1049 = vadd.f32 0.0, %v1048
        %v1050 = vpop.f32.mrf.mxu0
        %1051 = vmatprep.mubr.f32.mxu0 0.0
        %1052 = vmatmul.mubr.f32.gmra.mxu0 %v850
        %v1053 = vpop.f32.mrf.mxu0
        %v1054 = vadd.f32 0.0, %v1053
        %v1055 = vpop.f32.mrf.mxu0
        %1056 = vmatprep.mubr.f32.mxu0 0.0
        %1057 = vmatmul.mubr.f32.gmra.mxu0 %v853
        %v1058 = vpop.f32.mrf.mxu0
        %v1059 = vadd.f32 0.0, %v1058
        %v1060 = vpop.f32.mrf.mxu0
        %1061 = vmatprep.mubr.f32.mxu0 0.0
        %1062 = vmatmul.mubr.f32.gmra.mxu0 %v856
        %v1063 = vpop.f32.mrf.mxu0
        %v1064 = vadd.f32 0.0, %v1063
        %v1065 = vpop.f32.mrf.mxu0
        %1066 = vmatprep.mubr.f32.mxu0 0.0
        %1067 = vmatmul.mubr.f32.gmra.mxu0 %v859
        %v1068 = vpop.f32.mrf.mxu0
        %v1069 = vadd.f32 0.0, %v1068
        %v1070 = vpop.f32.mrf.mxu0
        %1071 = vmatprep.mubr.f32.mxu0 0.0
        %1072 = vmatmul.mubr.f32.gmra.mxu0 %v862
        %v1073 = vpop.f32.mrf.mxu0
        %v1074 = vadd.f32 0.0, %v1073
        %v1075 = vpop.f32.mrf.mxu0
        %1076 = vmatprep.mubr.f32.mxu0 0.0
        %1077 = vmatmul.mubr.f32.gmra.mxu0 %v865
        %v1078 = vpop.f32.mrf.mxu0
        %v1079 = vadd.f32 0.0, %v1078
        %v1080 = vpop.f32.mrf.mxu0
        %1081 = vmatprep.mubr.f32.mxu0 0.0
        %1082 = vmatmul.mubr.f32.gmra.mxu0 %v868
        %v1083 = vpop.f32.mrf.mxu0
        %v1084 = vadd.f32 0.0, %v1083
        %v1085 = vpop.f32.mrf.mxu0
        %1086 = vmatprep.mubr.f32.mxu0 0.0
        %1087 = vmatmul.mubr.f32.gmra.mxu0 %v871
        %v1088 = vpop.f32.mrf.mxu0
        %v1089 = vadd.f32 0.0, %v1088
        %v1090 = vpop.f32.mrf.mxu0
        %1091 = vmatprep.mubr.f32.mxu0 0.0
        %1092 = vmatmul.mubr.f32.gmra.mxu0 %v874
        %v1093 = vpop.f32.mrf.mxu0
        %v1094 = vadd.f32 0.0, %v1093
        %v1095 = vpop.f32.mrf.mxu0
        %1096 = vmatprep.mubr.f32.mxu0 0.0
        %1097 = vmatmul.mubr.f32.gmra.mxu0 %v877
        %v1098 = vpop.f32.mrf.mxu0
        %v1099 = vadd.f32 0.0, %v1098
        %v1100 = vpop.f32.mrf.mxu0
        %1101 = vmatprep.mubr.f32.mxu0 0.0
        %1102 = vmatmul.mubr.f32.gmra.mxu0 %v880
        %v1103 = vpop.f32.mrf.mxu0
        %v1104 = vadd.f32 0.0, %v1103
        %v1105 = vpop.f32.mrf.mxu0
        %1106 = vdwg.mxu0
        %1107 = vmatprep.subr.mxu0 0.0
        %1108 = vmatpush1.msra.mxu0 0.0
        %1109 = vmatprep.subr.mxu0 0.0
        %1110 = vmatpush1.msra.mxu0 0.0
        %1111 = vmatprep.subr.mxu0 0.0
        %1112 = vmatpush1.msra.mxu0 0.0
        %1113 = vmatprep.subr.mxu0 0.0
        %1114 = vmatpush1.msra.mxu0 0.0
        %1115 = vmatprep.subr.mxu0 0.0
        %1116 = vmatpush1.msra.mxu0 0.0
        %1117 = vmatprep.subr.mxu0 0.0
        %1118 = vmatpush1.msra.mxu0 0.0
        %1119 = vmatprep.subr.mxu0 0.0
        %1120 = vmatpush1.msra.mxu0 0.0
        %1121 = vmatprep.subr.mxu0 0.0
        %1122 = vmatpush1.msra.mxu0 0.0
        %1123 = vmatprep.subr.mxu0 0.0
        %1124 = vmatpush1.msra.mxu0 0.0
        %1125 = vmatprep.subr.mxu0 0.0
        %1126 = vmatpush1.msra.mxu0 0.0
        %1127 = vmatprep.subr.mxu0 0.0
        %1128 = vmatpush1.msra.mxu0 0.0
        %1129 = vmatprep.subr.mxu0 0.0
        %1130 = vmatpush1.msra.mxu0 0.0
        %1131 = vmatprep.subr.mxu0 0.0
        %1132 = vmatpush1.msra.mxu0 %v781
        %1133 = vmatprep.subr.mxu0 0.0
        %1134 = vmatpush1.msra.mxu0 %v780
        %1135 = vmatprep.subr.mxu0 0.0
        %1136 = vmatpush1.msra.mxu0 %v779
        %1137 = vmatprep.subr.mxu0 0.0
        %1138 = vmatpush1.msra.mxu0 %v778
        %1139 = vmatprep.subr.mxu0 0.0
        %1140 = vmatpush2.msra.mxu0 0.0
        %1141 = vmatprep.subr.mxu0 0.0
        %1142 = vmatpush2.msra.mxu0 0.0
        %1143 = vmatprep.subr.mxu0 0.0
        %1144 = vmatpush2.msra.mxu0 0.0
        %1145 = vmatprep.subr.mxu0 0.0
        %1146 = vmatpush2.msra.mxu0 0.0
        %1147 = vmatprep.subr.mxu0 0.0
        %1148 = vmatpush2.msra.mxu0 0.0
        %1149 = vmatprep.subr.mxu0 0.0
        %1150 = vmatpush2.msra.mxu0 0.0
        %1151 = vmatprep.subr.mxu0 0.0
        %1152 = vmatpush2.msra.mxu0 0.0
        %1153 = vmatprep.subr.mxu0 0.0
        %1154 = vmatpush2.msra.mxu0 0.0
        %1155 = vmatprep.subr.mxu0 0.0
        %1156 = vmatpush2.msra.mxu0 0.0
        %1157 = vmatprep.subr.mxu0 0.0
        %1158 = vmatpush2.msra.mxu0 0.0
        %1159 = vmatprep.subr.mxu0 0.0
        %1160 = vmatpush2.msra.mxu0 0.0
        %1161 = vmatprep.subr.mxu0 0.0
        %1162 = vmatpush2.msra.mxu0 0.0
        %1163 = vmatprep.subr.mxu0 0.0
        %1164 = vmatpush2.msra.mxu0 0.0
        %1165 = vmatprep.subr.mxu0 0.0
        %1166 = vmatpush2.msra.mxu0 0.0
        %1167 = vmatprep.subr.mxu0 0.0
        %1168 = vmatpush2.msra.mxu0 0.0
        %1169 = vmatprep.subr.mxu0 0.0
        %1170 = vmatpush2.msra.mxu0 0.0
        %1171 = vmatprep.mubr.f32.mxu0 0.0
        %1172 = vmatmul.mubr.f32.gmra.mxu0 %v298
        %v1173 = vpop.f32.mrf.mxu0
        %v1174 = vadd.f32 %v949, %v1173
        %v1175 = vpop.f32.mrf.mxu0
        %1176 = vmatprep.mubr.f32.mxu0 0.0
        %1177 = vmatmul.mubr.f32.gmra.mxu0 %v301
        %v1178 = vpop.f32.mrf.mxu0
        %v1179 = vadd.f32 %v954, %v1178
        %v1180 = vpop.f32.mrf.mxu0
        %1181 = vmatprep.mubr.f32.mxu0 0.0
        %1182 = vmatmul.mubr.f32.gmra.mxu0 %v304
        %v1183 = vpop.f32.mrf.mxu0
        %v1184 = vadd.f32 %v959, %v1183
        %v1185 = vpop.f32.mrf.mxu0
        %1186 = vmatprep.mubr.f32.mxu0 0.0
        %1187 = vmatmul.mubr.f32.gmra.mxu0 %v307
        %v1188 = vpop.f32.mrf.mxu0
        %v1189 = vadd.f32 %v964, %v1188
        %v1190 = vpop.f32.mrf.mxu0
        %1191 = vmatprep.mubr.f32.mxu0 0.0
        %1192 = vmatmul.mubr.f32.gmra.mxu0 %v310
        %v1193 = vpop.f32.mrf.mxu0
        %v1194 = vadd.f32 %v969, %v1193
        %v1195 = vpop.f32.mrf.mxu0
        %1196 = vmatprep.mubr.f32.mxu0 0.0
        %1197 = vmatmul.mubr.f32.gmra.mxu0 %v313
        %v1198 = vpop.f32.mrf.mxu0
        %v1199 = vadd.f32 %v974, %v1198
        %v1200 = vpop.f32.mrf.mxu0
        %1201 = vmatprep.mubr.f32.mxu0 0.0
        %1202 = vmatmul.mubr.f32.gmra.mxu0 %v316
        %v1203 = vpop.f32.mrf.mxu0
        %v1204 = vadd.f32 %v979, %v1203
        %v1205 = vpop.f32.mrf.mxu0
        %1206 = vmatprep.mubr.f32.mxu0 0.0
        %1207 = vmatmul.mubr.f32.gmra.mxu0 %v319
        %v1208 = vpop.f32.mrf.mxu0
        %v1209 = vadd.f32 %v984, %v1208
        %v1210 = vpop.f32.mrf.mxu0
        %1211 = vmatprep.mubr.f32.mxu0 0.0
        %1212 = vmatmul.mubr.f32.gmra.mxu0 %v322
        %v1213 = vpop.f32.mrf.mxu0
        %v1214 = vadd.f32 %v989, %v1213
        %v1215 = vpop.f32.mrf.mxu0
        %1216 = vmatprep.mubr.f32.mxu0 0.0
        %1217 = vmatmul.mubr.f32.gmra.mxu0 %v325
        %v1218 = vpop.f32.mrf.mxu0
        %v1219 = vadd.f32 %v994, %v1218
        %v1220 = vpop.f32.mrf.mxu0
        %1221 = vmatprep.mubr.f32.mxu0 0.0
        %1222 = vmatmul.mubr.f32.gmra.mxu0 %v328
        %v1223 = vpop.f32.mrf.mxu0
        %v1224 = vadd.f32 %v999, %v1223
        %v1225 = vpop.f32.mrf.mxu0
        %1226 = vmatprep.mubr.f32.mxu0 0.0
        %1227 = vmatmul.mubr.f32.gmra.mxu0 %v331
        %v1228 = vpop.f32.mrf.mxu0
        %v1229 = vadd.f32 %v1004, %v1228
        %v1230 = vpop.f32.mrf.mxu0
        %1231 = vmatprep.mubr.f32.mxu0 0.0
        %1232 = vmatmul.mubr.f32.gmra.mxu0 %v334
        %v1233 = vpop.f32.mrf.mxu0
        %v1234 = vadd.f32 %v1009, %v1233
        %v1235 = vpop.f32.mrf.mxu0
        %1236 = vmatprep.mubr.f32.mxu0 0.0
        %1237 = vmatmul.mubr.f32.gmra.mxu0 %v337
        %v1238 = vpop.f32.mrf.mxu0
        %v1239 = vadd.f32 %v1014, %v1238
        %v1240 = vpop.f32.mrf.mxu0
        %1241 = vmatprep.mubr.f32.mxu0 0.0
        %1242 = vmatmul.mubr.f32.gmra.mxu0 %v340
        %v1243 = vpop.f32.mrf.mxu0
        %v1244 = vadd.f32 %v1019, %v1243
        %v1245 = vpop.f32.mrf.mxu0
        %1246 = vmatprep.mubr.f32.mxu0 0.0
        %1247 = vmatmul.mubr.f32.gmra.mxu0 %v343
        %v1248 = vpop.f32.mrf.mxu0
        %v1249 = vadd.f32 %v1024, %v1248
        %v1250 = vpop.f32.mrf.mxu0
        %1251 = vmatprep.mubr.f32.mxu0 0.0
        %1252 = vmatmul.mubr.f32.gmra.mxu0 %v346
        %v1253 = vpop.f32.mrf.mxu0
        %v1254 = vadd.f32 %v1029, %v1253
        %v1255 = vpop.f32.mrf.mxu0
        %1256 = vmatprep.mubr.f32.mxu0 0.0
        %1257 = vmatmul.mubr.f32.gmra.mxu0 %v349
        %v1258 = vpop.f32.mrf.mxu0
        %v1259 = vadd.f32 %v1034, %v1258
        %v1260 = vpop.f32.mrf.mxu0
        %1261 = vmatprep.mubr.f32.mxu0 0.0
        %1262 = vmatmul.mubr.f32.gmra.mxu0 %v352
        %v1263 = vpop.f32.mrf.mxu0
        %v1264 = vadd.f32 %v1039, %v1263
        %v1265 = vpop.f32.mrf.mxu0
        %1266 = vmatprep.mubr.f32.mxu0 0.0
        %1267 = vmatmul.mubr.f32.gmra.mxu0 %v355
        %v1268 = vpop.f32.mrf.mxu0
        %v1269 = vadd.f32 %v1044, %v1268
        %v1270 = vpop.f32.mrf.mxu0
        %1271 = vmatprep.mubr.f32.mxu0 0.0
        %1272 = vmatmul.mubr.f32.gmra.mxu0 %v358
        %v1273 = vpop.f32.mrf.mxu0
        %v1274 = vadd.f32 %v1049, %v1273
        %v1275 = vpop.f32.mrf.mxu0
        %1276 = vmatprep.mubr.f32.mxu0 0.0
        %1277 = vmatmul.mubr.f32.gmra.mxu0 %v361
        %v1278 = vpop.f32.mrf.mxu0
        %v1279 = vadd.f32 %v1054, %v1278
        %v1280 = vpop.f32.mrf.mxu0
        %1281 = vmatprep.mubr.f32.mxu0 0.0
        %1282 = vmatmul.mubr.f32.gmra.mxu0 %v364
        %v1283 = vpop.f32.mrf.mxu0
        %v1284 = vadd.f32 %v1059, %v1283
        %v1285 = vpop.f32.mrf.mxu0
        %1286 = vmatprep.mubr.f32.mxu0 0.0
        %1287 = vmatmul.mubr.f32.gmra.mxu0 %v367
        %v1288 = vpop.f32.mrf.mxu0
        %v1289 = vadd.f32 %v1064, %v1288
        %v1290 = vpop.f32.mrf.mxu0
        %1291 = vmatprep.mubr.f32.mxu0 0.0
        %1292 = vmatmul.mubr.f32.gmra.mxu0 %v370
        %v1293 = vpop.f32.mrf.mxu0
        %v1294 = vadd.f32 %v1069, %v1293
        %v1295 = vpop.f32.mrf.mxu0
        %1296 = vmatprep.mubr.f32.mxu0 0.0
        %1297 = vmatmul.mubr.f32.gmra.mxu0 %v373
        %v1298 = vpop.f32.mrf.mxu0
        %v1299 = vadd.f32 %v1074, %v1298
        %v1300 = vpop.f32.mrf.mxu0
        %1301 = vmatprep.mubr.f32.mxu0 0.0
        %1302 = vmatmul.mubr.f32.gmra.mxu0 %v376
        %v1303 = vpop.f32.mrf.mxu0
        %v1304 = vadd.f32 %v1079, %v1303
        %v1305 = vpop.f32.mrf.mxu0
        %1306 = vmatprep.mubr.f32.mxu0 0.0
        %1307 = vmatmul.mubr.f32.gmra.mxu0 %v379
        %v1308 = vpop.f32.mrf.mxu0
        %v1309 = vadd.f32 %v1084, %v1308
        %v1310 = vpop.f32.mrf.mxu0
        %1311 = vmatprep.mubr.f32.mxu0 0.0
        %1312 = vmatmul.mubr.f32.gmra.mxu0 %v382
        %v1313 = vpop.f32.mrf.mxu0
        %v1314 = vadd.f32 %v1089, %v1313
        %v1315 = vpop.f32.mrf.mxu0
        %1316 = vmatprep.mubr.f32.mxu0 0.0
        %1317 = vmatmul.mubr.f32.gmra.mxu0 %v385
        %v1318 = vpop.f32.mrf.mxu0
        %v1319 = vadd.f32 %v1094, %v1318
        %v1320 = vpop.f32.mrf.mxu0
        %1321 = vmatprep.mubr.f32.mxu0 0.0
        %1322 = vmatmul.mubr.f32.gmra.mxu0 %v388
        %v1323 = vpop.f32.mrf.mxu0
        %v1324 = vadd.f32 %v1099, %v1323
        %v1325 = vpop.f32.mrf.mxu0
        %1326 = vmatprep.mubr.f32.mxu0 0.0
        %1327 = vmatmul.mubr.f32.gmra.mxu0 %v391
        %v1328 = vpop.f32.mrf.mxu0
        %v1329 = vadd.f32 %v1104, %v1328
        %v1330 = vpop.f32.mrf.mxu0
        %1331 = vdwg.mxu0
        %v1332 = vld [vmem:[%s5] sm:$0x1]
        %v1334 = vlaneseq
        %v1335 = vshrl.u32 %v1334, 7
        %v1336 = vsub.s32 0, %v1335
        %v1337 = vrot.slane %v1332, %v1336
        %v1339 = vadd.f32 %v1174, %v1337
        %v1340 = vadd.f32 %v1179, %v1337
        %v1341 = vadd.f32 %v1184, %v1337
        %v1342 = vadd.f32 %v1189, %v1337
        %v1343 = vadd.f32 %v1194, %v1337
        %v1344 = vadd.f32 %v1199, %v1337
        %v1345 = vadd.f32 %v1204, %v1337
        %v1346 = vadd.f32 %v1209, %v1337
        %v1347 = vadd.f32 %v1214, %v1337
        %v1348 = vadd.f32 %v1219, %v1337
        %v1349 = vadd.f32 %v1224, %v1337
        %v1350 = vadd.f32 %v1229, %v1337
        %v1351 = vadd.f32 %v1234, %v1337
        %v1352 = vadd.f32 %v1239, %v1337
        %v1353 = vadd.f32 %v1244, %v1337
        %v1354 = vadd.f32 %v1249, %v1337
        %v1355 = vadd.f32 %v1254, %v1337
        %v1356 = vadd.f32 %v1259, %v1337
        %v1357 = vadd.f32 %v1264, %v1337
        %v1358 = vadd.f32 %v1269, %v1337
        %v1359 = vadd.f32 %v1274, %v1337
        %v1360 = vadd.f32 %v1279, %v1337
        %v1361 = vadd.f32 %v1284, %v1337
        %v1362 = vadd.f32 %v1289, %v1337
        %v1363 = vadd.f32 %v1294, %v1337
        %v1364 = vadd.f32 %v1299, %v1337
        %v1365 = vadd.f32 %v1304, %v1337
        %v1366 = vadd.f32 %v1309, %v1337
        %v1367 = vadd.f32 %v1314, %v1337
        %v1368 = vadd.f32 %v1319, %v1337
        %v1369 = vadd.f32 %v1324, %v1337
        %v1370 = vadd.f32 %v1329, %v1337
        %v1371 = vadd.f32 %v1339, 3.0
        %v1372 = vadd.f32 %v1340, 3.0
        %v1373 = vadd.f32 %v1341, 3.0
        %v1374 = vadd.f32 %v1342, 3.0
        %v1375 = vadd.f32 %v1343, 3.0
        %v1376 = vadd.f32 %v1344, 3.0
        %v1377 = vadd.f32 %v1345, 3.0
        %v1378 = vadd.f32 %v1346, 3.0
        %v1379 = vadd.f32 %v1347, 3.0
        %v1380 = vadd.f32 %v1348, 3.0
        %v1381 = vadd.f32 %v1349, 3.0
        %v1382 = vadd.f32 %v1350, 3.0
        %v1383 = vadd.f32 %v1351, 3.0
        %v1384 = vadd.f32 %v1352, 3.0
        %v1385 = vadd.f32 %v1353, 3.0
        %v1386 = vadd.f32 %v1354, 3.0
        %v1387 = vadd.f32 %v1355, 3.0
        %v1388 = vadd.f32 %v1356, 3.0
        %v1389 = vadd.f32 %v1357, 3.0
        %v1390 = vadd.f32 %v1358, 3.0
        %v1391 = vadd.f32 %v1359, 3.0
        %v1392 = vadd.f32 %v1360, 3.0
        %v1393 = vadd.f32 %v1361, 3.0
        %v1394 = vadd.f32 %v1362, 3.0
        %v1395 = vadd.f32 %v1363, 3.0
        %v1396 = vadd.f32 %v1364, 3.0
        %v1397 = vadd.f32 %v1365, 3.0
        %v1398 = vadd.f32 %v1366, 3.0
        %v1399 = vadd.f32 %v1367, 3.0
        %v1400 = vadd.f32 %v1368, 3.0
        %v1401 = vadd.f32 %v1369, 3.0
        %v1402 = vadd.f32 %v1370, 3.0
        %v1403 = vmax.f32 %v1371, 0.0
        %v1404 = vmax.f32 %v1372, 0.0
        %v1405 = vmax.f32 %v1373, 0.0
        %v1406 = vmax.f32 %v1374, 0.0
        %v1407 = vmax.f32 %v1375, 0.0
        %v1408 = vmax.f32 %v1376, 0.0
        %v1409 = vmax.f32 %v1377, 0.0
        %v1410 = vmax.f32 %v1378, 0.0
        %v1411 = vmax.f32 %v1379, 0.0
        %v1412 = vmax.f32 %v1380, 0.0
        %v1413 = vmax.f32 %v1381, 0.0
        %v1414 = vmax.f32 %v1382, 0.0
        %v1415 = vmax.f32 %v1383, 0.0
        %v1416 = vmax.f32 %v1384, 0.0
        %v1417 = vmax.f32 %v1385, 0.0
        %v1418 = vmax.f32 %v1386, 0.0
        %v1419 = vmax.f32 %v1387, 0.0
        %v1420 = vmax.f32 %v1388, 0.0
        %v1421 = vmax.f32 %v1389, 0.0
        %v1422 = vmax.f32 %v1390, 0.0
        %v1423 = vmax.f32 %v1391, 0.0
        %v1424 = vmax.f32 %v1392, 0.0
        %v1425 = vmax.f32 %v1393, 0.0
        %v1426 = vmax.f32 %v1394, 0.0
        %v1427 = vmax.f32 %v1395, 0.0
        %v1428 = vmax.f32 %v1396, 0.0
        %v1429 = vmax.f32 %v1397, 0.0
        %v1430 = vmax.f32 %v1398, 0.0
        %v1431 = vmax.f32 %v1399, 0.0
        %v1432 = vmax.f32 %v1400, 0.0
        %v1433 = vmax.f32 %v1401, 0.0
        %v1434 = vmax.f32 %v1402, 0.0
        %v1435 = vmin.f32 %v1403, 6.0
        %v1436 = vmin.f32 %v1404, 6.0
        %v1437 = vmin.f32 %v1405, 6.0
        %v1438 = vmin.f32 %v1406, 6.0
        %v1439 = vmin.f32 %v1407, 6.0
        %v1440 = vmin.f32 %v1408, 6.0
        %v1441 = vmin.f32 %v1409, 6.0
        %v1442 = vmin.f32 %v1410, 6.0
        %v1443 = vmin.f32 %v1411, 6.0
        %v1444 = vmin.f32 %v1412, 6.0
        %v1445 = vmin.f32 %v1413, 6.0
        %v1446 = vmin.f32 %v1414, 6.0
        %v1447 = vmin.f32 %v1415, 6.0
        %v1448 = vmin.f32 %v1416, 6.0
        %v1449 = vmin.f32 %v1417, 6.0
        %v1450 = vmin.f32 %v1418, 6.0
        %v1451 = vmin.f32 %v1419, 6.0
        %v1452 = vmin.f32 %v1420, 6.0
        %v1453 = vmin.f32 %v1421, 6.0
        %v1454 = vmin.f32 %v1422, 6.0
        %v1455 = vmin.f32 %v1423, 6.0
        %v1456 = vmin.f32 %v1424, 6.0
        %v1457 = vmin.f32 %v1425, 6.0
        %v1458 = vmin.f32 %v1426, 6.0
        %v1459 = vmin.f32 %v1427, 6.0
        %v1460 = vmin.f32 %v1428, 6.0
        %v1461 = vmin.f32 %v1429, 6.0
        %v1462 = vmin.f32 %v1430, 6.0
        %v1463 = vmin.f32 %v1431, 6.0
        %v1464 = vmin.f32 %v1432, 6.0
        %v1465 = vmin.f32 %v1433, 6.0
        %v1466 = vmin.f32 %v1434, 6.0
        %v1467 = vmul.f32 %v1339, %v1435
        %v1468 = vmul.f32 %v1340, %v1436
        %v1469 = vmul.f32 %v1341, %v1437
        %v1470 = vmul.f32 %v1342, %v1438
        %v1471 = vmul.f32 %v1343, %v1439
        %v1472 = vmul.f32 %v1344, %v1440
        %v1473 = vmul.f32 %v1345, %v1441
        %v1474 = vmul.f32 %v1346, %v1442
        %v1475 = vmul.f32 %v1347, %v1443
        %v1476 = vmul.f32 %v1348, %v1444
        %v1477 = vmul.f32 %v1349, %v1445
        %v1478 = vmul.f32 %v1350, %v1446
        %v1479 = vmul.f32 %v1351, %v1447
        %v1480 = vmul.f32 %v1352, %v1448
        %v1481 = vmul.f32 %v1353, %v1449
        %v1482 = vmul.f32 %v1354, %v1450
        %v1483 = vmul.f32 %v1355, %v1451
        %v1484 = vmul.f32 %v1356, %v1452
        %v1485 = vmul.f32 %v1357, %v1453
        %v1486 = vmul.f32 %v1358, %v1454
        %v1487 = vmul.f32 %v1359, %v1455
        %v1488 = vmul.f32 %v1360, %v1456
        %v1489 = vmul.f32 %v1361, %v1457
        %v1490 = vmul.f32 %v1362, %v1458
        %v1491 = vmul.f32 %v1363, %v1459
        %v1492 = vmul.f32 %v1364, %v1460
        %v1493 = vmul.f32 %v1365, %v1461
        %v1494 = vmul.f32 %v1366, %v1462
        %v1495 = vmul.f32 %v1367, %v1463
        %v1496 = vmul.f32 %v1368, %v1464
        %v1497 = vmul.f32 %v1369, %v1465
        %v1498 = vmul.f32 %v1370, %v1466
        %v1499 = vmul.f32 %v1467, 0.16666667
        %v1500 = vmul.f32 %v1468, 0.16666667
        %v1501 = vmul.f32 %v1469, 0.16666667
        %v1502 = vmul.f32 %v1470, 0.16666667
        %v1503 = vmul.f32 %v1471, 0.16666667
        %v1504 = vmul.f32 %v1472, 0.16666667
        %v1505 = vmul.f32 %v1473, 0.16666667
        %v1506 = vmul.f32 %v1474, 0.16666667
        %v1507 = vmul.f32 %v1475, 0.16666667
        %v1508 = vmul.f32 %v1476, 0.16666667
        %v1509 = vmul.f32 %v1477, 0.16666667
        %v1510 = vmul.f32 %v1478, 0.16666667
        %v1511 = vmul.f32 %v1479, 0.16666667
        %v1512 = vmul.f32 %v1480, 0.16666667
        %v1513 = vmul.f32 %v1481, 0.16666667
        %v1514 = vmul.f32 %v1482, 0.16666667
        %v1515 = vmul.f32 %v1483, 0.16666667
        %v1516 = vmul.f32 %v1484, 0.16666667
        %v1517 = vmul.f32 %v1485, 0.16666667
        %v1518 = vmul.f32 %v1486, 0.16666667
        %v1519 = vmul.f32 %v1487, 0.16666667
        %v1520 = vmul.f32 %v1488, 0.16666667
        %v1521 = vmul.f32 %v1489, 0.16666667
        %v1522 = vmul.f32 %v1490, 0.16666667
        %v1523 = vmul.f32 %v1491, 0.16666667
        %v1524 = vmul.f32 %v1492, 0.16666667
        %v1525 = vmul.f32 %v1493, 0.16666667
        %v1526 = vmul.f32 %v1494, 0.16666667
        %v1527 = vmul.f32 %v1495, 0.16666667
        %v1528 = vmul.f32 %v1496, 0.16666667
        %v1529 = vmul.f32 %v1497, 0.16666667
        %v1530 = vmul.f32 %v1498, 0.16666667
        %1531 = vst.msk [vmem:[%s245] sm:$0xff] %vm296, %v253
        %1532 = vst.msk [vmem:[%s245 + $0x8] sm:$0xff] %vm296, %v254
        %1533 = vst.msk [vmem:[%s245 + $0x10] sm:$0xff] %vm296, %v255
        %1534 = vst.msk [vmem:[%s245 + $0x18] sm:$0xff] %vm296, %v256
        %1535 = vst.msk [vmem:[%s245 + $0x20] sm:$0xff] %vm296, %v257
        %1536 = vst.msk [vmem:[%s245 + $0x28] sm:$0xff] %vm296, %v258
        %1537 = vst.msk [vmem:[%s245 + $0x30] sm:$0xff] %vm296, %v259
        %1538 = vst.msk [vmem:[%s245 + $0x38] sm:$0xff] %vm296, %v260
        %1539 = vst.msk [vmem:[%s245 + $0x40] sm:$0xff] %vm296, %v261
        %1540 = vst.msk [vmem:[%s245 + $0x48] sm:$0xff] %vm296, %v262
        %1541 = vst.msk [vmem:[%s245 + $0x50] sm:$0xff] %vm296, %v263
        %1542 = vst.msk [vmem:[%s245 + $0x58] sm:$0xff] %vm296, %v264
        %1543 = vst.msk [vmem:[%s245 + $0x60] sm:$0xff] %vm296, %v265
        %1544 = vst.msk [vmem:[%s245 + $0x68] sm:$0xff] %vm296, %v266
        %1545 = vst.msk [vmem:[%s245 + $0x70] sm:$0xff] %vm296, %v267
        %1546 = vst.msk [vmem:[%s245 + $0x78] sm:$0xff] %vm296, %v268
        %1547 = vst.msk [vmem:[%s245 + $0x80] sm:$0xff] %vm296, %v269
        %1548 = vst.msk [vmem:[%s245 + $0x88] sm:$0xff] %vm296, %v270
        %1549 = vst.msk [vmem:[%s245 + $0x90] sm:$0xff] %vm296, %v271
        %1550 = vst.msk [vmem:[%s245 + $0x98] sm:$0xff] %vm296, %v272
        %1551 = vst.msk [vmem:[%s245 + $0xa0] sm:$0xff] %vm296, %v273
        %1552 = vst.msk [vmem:[%s245 + $0xa8] sm:$0xff] %vm296, %v274
        %1553 = vst.msk [vmem:[%s245 + $0xb0] sm:$0xff] %vm296, %v275
        %1554 = vst.msk [vmem:[%s245 + $0xb8] sm:$0xff] %vm296, %v276
        %1555 = vst.msk [vmem:[%s245 + $0xc0] sm:$0xff] %vm296, %v277
        %1556 = vst.msk [vmem:[%s245 + $0xc8] sm:$0xff] %vm296, %v278
        %1557 = vst.msk [vmem:[%s245 + $0xd0] sm:$0xff] %vm296, %v279
        %1558 = vst.msk [vmem:[%s245 + $0xd8] sm:$0xff] %vm296, %v280
        %1559 = vst.msk [vmem:[%s245 + $0xe0] sm:$0xff] %vm296, %v281
        %1560 = vst.msk [vmem:[%s245 + $0xe8] sm:$0xff] %vm296, %v282
        %1561 = vst.msk [vmem:[%s245 + $0xf0] sm:$0xff] %vm296, %v283
        %1562 = vst.msk [vmem:[%s245 + $0xf8] sm:$0xff] %vm296, %v284
        %1563 = vrot.lane.b32.xlu0 %v746, 32
        %v1564 = vpop.permute.xlu0 %1563
        %1565 = vrot.lane.b32.xlu0 %v747, 32
        %v1566 = vpop.permute.xlu0 %1565
        %1567 = vrot.lane.b32.xlu0 %v748, 32
        %v1568 = vpop.permute.xlu0 %1567
        %1569 = vrot.lane.b32.xlu0 %v749, 32
        %v1570 = vpop.permute.xlu0 %1569
        %1571 = vrot.lane.b32.xlu0 %v750, 32
        %v1572 = vpop.permute.xlu0 %1571
        %1573 = vrot.lane.b32.xlu0 %v751, 32
        %v1574 = vpop.permute.xlu0 %1573
        %1575 = vrot.lane.b32.xlu0 %v752, 32
        %v1576 = vpop.permute.xlu0 %1575
        %1577 = vrot.lane.b32.xlu0 %v753, 32
        %v1578 = vpop.permute.xlu0 %1577
        %1579 = vrot.lane.b32.xlu0 %v754, 32
        %v1580 = vpop.permute.xlu0 %1579
        %1581 = vrot.lane.b32.xlu0 %v755, 32
        %v1582 = vpop.permute.xlu0 %1581
        %1583 = vrot.lane.b32.xlu0 %v756, 32
        %v1584 = vpop.permute.xlu0 %1583
        %1585 = vrot.lane.b32.xlu0 %v757, 32
        %v1586 = vpop.permute.xlu0 %1585
        %1587 = vrot.lane.b32.xlu0 %v758, 32
        %v1588 = vpop.permute.xlu0 %1587
        %1589 = vrot.lane.b32.xlu0 %v759, 32
        %v1590 = vpop.permute.xlu0 %1589
        %1591 = vrot.lane.b32.xlu0 %v760, 32
        %v1592 = vpop.permute.xlu0 %1591
        %1593 = vrot.lane.b32.xlu0 %v761, 32
        %v1594 = vpop.permute.xlu0 %1593
        %1595 = vrot.lane.b32.xlu0 %v762, 32
        %v1596 = vpop.permute.xlu0 %1595
        %1597 = vrot.lane.b32.xlu0 %v763, 32
        %v1598 = vpop.permute.xlu0 %1597
        %1599 = vrot.lane.b32.xlu0 %v764, 32
        %v1600 = vpop.permute.xlu0 %1599
        %1601 = vrot.lane.b32.xlu0 %v765, 32
        %v1602 = vpop.permute.xlu0 %1601
        %1603 = vrot.lane.b32.xlu0 %v766, 32
        %v1604 = vpop.permute.xlu0 %1603
        %1605 = vrot.lane.b32.xlu0 %v767, 32
        %v1606 = vpop.permute.xlu0 %1605
        %1607 = vrot.lane.b32.xlu0 %v768, 32
        %v1608 = vpop.permute.xlu0 %1607
        %1609 = vrot.lane.b32.xlu0 %v769, 32
        %v1610 = vpop.permute.xlu0 %1609
        %1611 = vrot.lane.b32.xlu0 %v770, 32
        %v1612 = vpop.permute.xlu0 %1611
        %1613 = vrot.lane.b32.xlu0 %v771, 32
        %v1614 = vpop.permute.xlu0 %1613
        %1615 = vrot.lane.b32.xlu0 %v772, 32
        %v1616 = vpop.permute.xlu0 %1615
        %1617 = vrot.lane.b32.xlu0 %v773, 32
        %v1618 = vpop.permute.xlu0 %1617
        %1619 = vrot.lane.b32.xlu0 %v774, 32
        %v1620 = vpop.permute.xlu0 %1619
        %1621 = vrot.lane.b32.xlu0 %v775, 32
        %v1622 = vpop.permute.xlu0 %1621
        %1623 = vrot.lane.b32.xlu0 %v776, 32
        %v1624 = vpop.permute.xlu0 %1623
        %1625 = vrot.lane.b32.xlu0 %v777, 32
        %v1626 = vpop.permute.xlu0 %1625
        %vm1659 = vcmask 523520
        %1660 = vst.msk [vmem:[%s245] sm:$0xff] %vm1659, %v1564
        %1661 = vst.msk [vmem:[%s245 + $0x8] sm:$0xff] %vm1659, %v1566
        %1662 = vst.msk [vmem:[%s245 + $0x10] sm:$0xff] %vm1659, %v1568
        %1663 = vst.msk [vmem:[%s245 + $0x18] sm:$0xff] %vm1659, %v1570
        %1664 = vst.msk [vmem:[%s245 + $0x20] sm:$0xff] %vm1659, %v1572
        %1665 = vst.msk [vmem:[%s245 + $0x28] sm:$0xff] %vm1659, %v1574
        %1666 = vst.msk [vmem:[%s245 + $0x30] sm:$0xff] %vm1659, %v1576
        %1667 = vst.msk [vmem:[%s245 + $0x38] sm:$0xff] %vm1659, %v1578
        %1668 = vst.msk [vmem:[%s245 + $0x40] sm:$0xff] %vm1659, %v1580
        %1669 = vst.msk [vmem:[%s245 + $0x48] sm:$0xff] %vm1659, %v1582
        %1670 = vst.msk [vmem:[%s245 + $0x50] sm:$0xff] %vm1659, %v1584
        %1671 = vst.msk [vmem:[%s245 + $0x58] sm:$0xff] %vm1659, %v1586
        %1672 = vst.msk [vmem:[%s245 + $0x60] sm:$0xff] %vm1659, %v1588
        %1673 = vst.msk [vmem:[%s245 + $0x68] sm:$0xff] %vm1659, %v1590
        %1674 = vst.msk [vmem:[%s245 + $0x70] sm:$0xff] %vm1659, %v1592
        %1675 = vst.msk [vmem:[%s245 + $0x78] sm:$0xff] %vm1659, %v1594
        %1676 = vst.msk [vmem:[%s245 + $0x80] sm:$0xff] %vm1659, %v1596
        %1677 = vst.msk [vmem:[%s245 + $0x88] sm:$0xff] %vm1659, %v1598
        %1678 = vst.msk [vmem:[%s245 + $0x90] sm:$0xff] %vm1659, %v1600
        %1679 = vst.msk [vmem:[%s245 + $0x98] sm:$0xff] %vm1659, %v1602
        %1680 = vst.msk [vmem:[%s245 + $0xa0] sm:$0xff] %vm1659, %v1604
        %1681 = vst.msk [vmem:[%s245 + $0xa8] sm:$0xff] %vm1659, %v1606
        %1682 = vst.msk [vmem:[%s245 + $0xb0] sm:$0xff] %vm1659, %v1608
        %1683 = vst.msk [vmem:[%s245 + $0xb8] sm:$0xff] %vm1659, %v1610
        %1684 = vst.msk [vmem:[%s245 + $0xc0] sm:$0xff] %vm1659, %v1612
        %1685 = vst.msk [vmem:[%s245 + $0xc8] sm:$0xff] %vm1659, %v1614
        %1686 = vst.msk [vmem:[%s245 + $0xd0] sm:$0xff] %vm1659, %v1616
        %1687 = vst.msk [vmem:[%s245 + $0xd8] sm:$0xff] %vm1659, %v1618
        %1688 = vst.msk [vmem:[%s245 + $0xe0] sm:$0xff] %vm1659, %v1620
        %1689 = vst.msk [vmem:[%s245 + $0xe8] sm:$0xff] %vm1659, %v1622
        %1690 = vst.msk [vmem:[%s245 + $0xf0] sm:$0xff] %vm1659, %v1624
        %1691 = vst.msk [vmem:[%s245 + $0xf8] sm:$0xff] %vm1659, %v1626
        %1724 = vrot.lane.b32.xlu0 %v1499, 64
        %v1725 = vpop.permute.xlu0 %1724
        %1726 = vrot.lane.b32.xlu0 %v1500, 64
        %v1727 = vpop.permute.xlu0 %1726
        %1728 = vrot.lane.b32.xlu0 %v1501, 64
        %v1729 = vpop.permute.xlu0 %1728
        %1730 = vrot.lane.b32.xlu0 %v1502, 64
        %v1731 = vpop.permute.xlu0 %1730
        %1732 = vrot.lane.b32.xlu0 %v1503, 64
        %v1733 = vpop.permute.xlu0 %1732
        %1734 = vrot.lane.b32.xlu0 %v1504, 64
        %v1735 = vpop.permute.xlu0 %1734
        %1736 = vrot.lane.b32.xlu0 %v1505, 64
        %v1737 = vpop.permute.xlu0 %1736
        %1738 = vrot.lane.b32.xlu0 %v1506, 64
        %v1739 = vpop.permute.xlu0 %1738
        %1740 = vrot.lane.b32.xlu0 %v1507, 64
        %v1741 = vpop.permute.xlu0 %1740
        %1742 = vrot.lane.b32.xlu0 %v1508, 64
        %v1743 = vpop.permute.xlu0 %1742
        %1744 = vrot.lane.b32.xlu0 %v1509, 64
        %v1745 = vpop.permute.xlu0 %1744
        %1746 = vrot.lane.b32.xlu0 %v1510, 64
        %v1747 = vpop.permute.xlu0 %1746
        %1748 = vrot.lane.b32.xlu0 %v1511, 64
        %v1749 = vpop.permute.xlu0 %1748
        %1750 = vrot.lane.b32.xlu0 %v1512, 64
        %v1751 = vpop.permute.xlu0 %1750
        %1752 = vrot.lane.b32.xlu0 %v1513, 64
        %v1753 = vpop.permute.xlu0 %1752
        %1754 = vrot.lane.b32.xlu0 %v1514, 64
        %v1755 = vpop.permute.xlu0 %1754
        %1756 = vrot.lane.b32.xlu0 %v1515, 64
        %v1757 = vpop.permute.xlu0 %1756
        %1758 = vrot.lane.b32.xlu0 %v1516, 64
        %v1759 = vpop.permute.xlu0 %1758
        %1760 = vrot.lane.b32.xlu0 %v1517, 64
        %v1761 = vpop.permute.xlu0 %1760
        %1762 = vrot.lane.b32.xlu0 %v1518, 64
        %v1763 = vpop.permute.xlu0 %1762
        %1764 = vrot.lane.b32.xlu0 %v1519, 64
        %v1765 = vpop.permute.xlu0 %1764
        %1766 = vrot.lane.b32.xlu0 %v1520, 64
        %v1767 = vpop.permute.xlu0 %1766
        %1768 = vrot.lane.b32.xlu0 %v1521, 64
        %v1769 = vpop.permute.xlu0 %1768
        %1770 = vrot.lane.b32.xlu0 %v1522, 64
        %v1771 = vpop.permute.xlu0 %1770
        %1772 = vrot.lane.b32.xlu0 %v1523, 64
        %v1773 = vpop.permute.xlu0 %1772
        %1774 = vrot.lane.b32.xlu0 %v1524, 64
        %v1775 = vpop.permute.xlu0 %1774
        %1776 = vrot.lane.b32.xlu0 %v1525, 64
        %v1777 = vpop.permute.xlu0 %1776
        %1778 = vrot.lane.b32.xlu0 %v1526, 64
        %v1779 = vpop.permute.xlu0 %1778
        %1780 = vrot.lane.b32.xlu0 %v1527, 64
        %v1781 = vpop.permute.xlu0 %1780
        %1782 = vrot.lane.b32.xlu0 %v1528, 64
        %v1783 = vpop.permute.xlu0 %1782
        %1784 = vrot.lane.b32.xlu0 %v1529, 64
        %v1785 = vpop.permute.xlu0 %1784
        %1786 = vrot.lane.b32.xlu0 %v1530, 64
        %v1787 = vpop.permute.xlu0 %1786
        %vm1820 = vcmask 1048064
        %1821 = vst.msk [vmem:[%s245] sm:$0xff] %vm1820, %v1725
        %1822 = vst.msk [vmem:[%s245 + $0x8] sm:$0xff] %vm1820, %v1727
        %1823 = vst.msk [vmem:[%s245 + $0x10] sm:$0xff] %vm1820, %v1729
        %1824 = vst.msk [vmem:[%s245 + $0x18] sm:$0xff] %vm1820, %v1731
        %1825 = vst.msk [vmem:[%s245 + $0x20] sm:$0xff] %vm1820, %v1733
        %1826 = vst.msk [vmem:[%s245 + $0x28] sm:$0xff] %vm1820, %v1735
        %1827 = vst.msk [vmem:[%s245 + $0x30] sm:$0xff] %vm1820, %v1737
        %1828 = vst.msk [vmem:[%s245 + $0x38] sm:$0xff] %vm1820, %v1739
        %1829 = vst.msk [vmem:[%s245 + $0x40] sm:$0xff] %vm1820, %v1741
        %1830 = vst.msk [vmem:[%s245 + $0x48] sm:$0xff] %vm1820, %v1743
        %1831 = vst.msk [vmem:[%s245 + $0x50] sm:$0xff] %vm1820, %v1745
        %1832 = vst.msk [vmem:[%s245 + $0x58] sm:$0xff] %vm1820, %v1747
        %1833 = vst.msk [vmem:[%s245 + $0x60] sm:$0xff] %vm1820, %v1749
        %1834 = vst.msk [vmem:[%s245 + $0x68] sm:$0xff] %vm1820, %v1751
        %1835 = vst.msk [vmem:[%s245 + $0x70] sm:$0xff] %vm1820, %v1753
        %1836 = vst.msk [vmem:[%s245 + $0x78] sm:$0xff] %vm1820, %v1755
        %1837 = vst.msk [vmem:[%s245 + $0x80] sm:$0xff] %vm1820, %v1757
        %1838 = vst.msk [vmem:[%s245 + $0x88] sm:$0xff] %vm1820, %v1759
        %1839 = vst.msk [vmem:[%s245 + $0x90] sm:$0xff] %vm1820, %v1761
        %1840 = vst.msk [vmem:[%s245 + $0x98] sm:$0xff] %vm1820, %v1763
        %1841 = vst.msk [vmem:[%s245 + $0xa0] sm:$0xff] %vm1820, %v1765
        %1842 = vst.msk [vmem:[%s245 + $0xa8] sm:$0xff] %vm1820, %v1767
        %1843 = vst.msk [vmem:[%s245 + $0xb0] sm:$0xff] %vm1820, %v1769
        %1844 = vst.msk [vmem:[%s245 + $0xb8] sm:$0xff] %vm1820, %v1771
        %1845 = vst.msk [vmem:[%s245 + $0xc0] sm:$0xff] %vm1820, %v1773
        %1846 = vst.msk [vmem:[%s245 + $0xc8] sm:$0xff] %vm1820, %v1775
        %1847 = vst.msk [vmem:[%s245 + $0xd0] sm:$0xff] %vm1820, %v1777
        %1848 = vst.msk [vmem:[%s245 + $0xd8] sm:$0xff] %vm1820, %v1779
        %1849 = vst.msk [vmem:[%s245 + $0xe0] sm:$0xff] %vm1820, %v1781
        %1850 = vst.msk [vmem:[%s245 + $0xe8] sm:$0xff] %vm1820, %v1783
        %1851 = vst.msk [vmem:[%s245 + $0xf0] sm:$0xff] %vm1820, %v1785
        %1852 = vst.msk [vmem:[%s245 + $0xf8] sm:$0xff] %vm1820, %v1787
        %s1853 = sand.u32 %s159, 1
        %s1854 = scalar_lea.sflag [#allocation3], %s1853
        %s1855 = sand.u32 %s159, 1
        %s1856 = smul.addr %s1855, 256
        %s1857 = scalar_lea.vmem [#allocation2], %s1856
        // Predicated region
        $region45: #{tpu_custom_call.1} parent=43 // pred_check
          %p1858 = pneg %p169
        $region46: #{tpu_custom_call.1} parent=43 // pred_check_branch
          %1860 = sbr.rel (%p1858) target = $region48
        $region47: #{tpu_custom_call.1} parent=43 // pred_region
          %s1861 = smul.u32 32, %s20
          %s1863 = ssub.s32 4096, 4096
          %1864 = vsyncadd %s1854, %s1863
          %s1865 = smul.addr %s1861, 128
          %s1866 = scalar_lea.hbm %s6, %s1865
          %s1867 = sshll.u32 %s1857, 4
          %s1868 = int_to_ptr.vmem [resolvable:$true] %s1867
          %1873 = dma.vmem_to_hbm [thread:$0]  %s1868, 4096, %s1866, %s1854, 128, 128, 8
        $region48: #{tpu_custom_call.1} parent=43 // pred_fallthru
          _
      $region44: #{tpu_custom_call.1} parent=5 // pred_fallthru
        _
      %p1874 = scmp.le.s32.totalorder 2, %s15
      // Predicated region
      $region49: #{tpu_custom_call.1} parent=5 // pred_check
        %p1875 = pneg %p1874
      $region50: #{tpu_custom_call.1} parent=5 // pred_check_branch
        %1877 = sbr.rel (%p1875) target = $region52
      $region51: #{tpu_custom_call.1} parent=5 // pred_region
        %s1878 = ssub.s32 %s15, 2
        // Predicated region
        $region53: #{tpu_custom_call.1} parent=51 // pred_check
          %p1879 = pneg %p175
        $region54: #{tpu_custom_call.1} parent=51 // pred_check_branch
          %1881 = sbr.rel (%p1879) target = $region56
        $region55: #{tpu_custom_call.1} parent=51 // pred_region
          %s1882 = sand.u32 %s160, 1
          %s1883 = scalar_lea.sflag [#allocation3], %s1882
          %s1884 = sand.u32 %s160, 1
          %s1885 = smul.addr %s1884, 256
          %s1886 = scalar_lea.vmem [#allocation2], %s1885
          %1887 = dma.done %s1883, 4096
        $region56: #{tpu_custom_call.1} parent=51 // pred_fallthru
          _
      $region52: #{tpu_custom_call.1} parent=5 // pred_fallthru
        _
    $region6: #{tpu_custom_call.1} parent=1 // loop_footer
      %s19 = sadd.s32 1, %s15
    $region7: #{tpu_custom_call.1} parent=1 // loop_footer_branch
      %14 = sbr.rel target = $region3
    $region8: #{tpu_custom_call.1} parent=1 // loop_exit
      _
    %1888 = vsyncpa [#allocation3], 1
    %s1889 = scalar_lea.sflag [#allocation3], 1
    %1890 = vsyncpa %s1889, 1

</llo_original>
